<compile_context>
chip_gen: v6e
topology: v6e:2x2x1
jax: 0.10.0
libtpu: 0.0.40
codegen_flags: <defaults>
</compile_context>

<pallas_src>
import jax
import jax.numpy as jnp
from jax.experimental import pallas as pl
from jax.experimental.pallas import tpu as pltpu


def classifier_kernel(x_ref, w_ref, b_ref, o_ref):
    # x_ref: (bb, C*H*W)  bf16/f32  -- one batch tile
    # w_ref: (C*H*W, num_classes)   -- 1/(H*W)-scaled weight, broadcast over spatial
    # b_ref: (1, num_classes) f32
    # Fused avg-pool + linear: a single MXU matmul with f32 accumulation.
    logits = jnp.dot(x_ref[...], w_ref[...], preferred_element_type=jnp.float32)
    logits = logits + b_ref[...]                              # (bb, num_classes)

    # LogSoftmax(dim=1), max-shifted for stability (tiny 10-lane reduce).
    m = jnp.max(logits, axis=-1, keepdims=True)
    shifted = logits - m
    lse = jnp.log(jnp.sum(jnp.exp(shifted), axis=-1, keepdims=True))
    o_ref[...] = (shifted - lse).astype(o_ref.dtype)


def make_classifier_forward(w, b, H, W, *, x_dtype=jnp.bfloat16, block_b=None):
    """Builds a jitted forward.  w: (num_classes, C), b: (num_classes,).

    All weight preprocessing (transpose, 1/(H*W) scale fold, spatial
    broadcast, dtype cast) happens ONCE here, not per call.
    """
    num_classes, C = w.shape
    K = C * H * W
    if block_b is None:
        # Double-buffered (block_b, K) inputs must fit v5e's 16 MiB scoped VMEM.
        block_b = 512 if x_dtype == jnp.bfloat16 else 256

    # W_big[c*H*W + s, n] = w[n, c] / (H*W): pooling mean folded into the
    # contraction so avgpool + fc1 is a single matmul over K = C*H*W.
    w_big = (jnp.repeat(w.T, H * W, axis=0) / jnp.float32(H * W)).astype(x_dtype)
    b_2d = b.reshape(1, num_classes).astype(jnp.float32)

    @jax.jit
    def forward(x):
        B = x.shape[0]
        # Contiguous reshape (free) + cast; bf16 halves HBM bytes for the only
        # meaningful traffic in this kernel.
        x_flat = x.reshape(B, K).astype(x_dtype)

        if B <= block_b:
            bb, grid_b, padded_B = B, 1, B        # full-dim block (allowed)
        else:
            bb = block_b                          # multiple of 8
            grid_b = pl.cdiv(B, bb)
            padded_B = grid_b * bb
            if padded_B != B:
                x_flat = jnp.pad(x_flat, ((0, padded_B - B), (0, 0)))

        out = pl.pallas_call(
            classifier_kernel,
            out_shape=jax.ShapeDtypeStruct((padded_B, num_classes), jnp.float32),
            grid=(grid_b,),
            in_specs=[
                pl.BlockSpec((bb, K), lambda i: (i, 0)),
                pl.BlockSpec((K, num_classes), lambda i: (0, 0)),  # resident
                pl.BlockSpec((1, num_classes), lambda i: (0, 0)),  # resident
            ],
            out_specs=pl.BlockSpec((bb, num_classes), lambda i: (i, 0)),
            compiler_params=pltpu.CompilerParams(
                dimension_semantics=("parallel",)),   # v7x: 2 TCs split batch
        )(x_flat, w_big, b_2d)
        return out[:B]

    return forward


if __name__ == "__main__":
    # fc1 = nn.Linear(1*1*16, 10) => C must be 16 for the PyTorch forward to work.
    B, C, H, W = 2, 16, 16, 16
    num_classes = 10

    key = jax.random.PRNGKey(0)
    kx, kw, kb = jax.random.split(key, 3)

    x = jax.random.normal(kx, (B, C, H, W), dtype=jnp.float32)
    # Init mimicking nn.Linear's uniform(-1/sqrt(fan_in), 1/sqrt(fan_in)).
    bound = 1.0 / jnp.sqrt(jnp.float32(C))
    w = jax.random.uniform(kw, (num_classes, C), minval=-bound, maxval=bound,
                           dtype=jnp.float32)
    b = jax.random.uniform(kb, (num_classes,), minval=-bound, maxval=bound,
                           dtype=jnp.float32)

    # Pure-JAX reference (original semantics: mean-pool -> linear -> log_softmax).
    pooled_ref = jnp.mean(x.reshape(B, C, -1), axis=-1)
    logits_ref = pooled_ref @ w.T + b
    ref = jax.nn.log_softmax(logits_ref, axis=1)

    # Default bf16-streaming path (HBM-optimal): loose tolerance vs f32 reference.
    forward_bf16 = make_classifier_forward(w, b, H, W, x_dtype=jnp.bfloat16)
    out = forward_bf16(x)
    jax.block_until_ready(out)
    assert out.shape == (B, num_classes)
    assert jnp.allclose(out, ref, atol=1e-2, rtol=1e-2), \
        float(jnp.max(jnp.abs(out - ref)))

    # f32 path: verifies the fused pooling-into-matmul formulation tightly.
    forward_f32 = make_classifier_forward(w, b, H, W, x_dtype=jnp.float32)
    out_f32 = forward_f32(x)
    jax.block_until_ready(out_f32)
    assert jnp.allclose(out_f32, ref, atol=1e-5, rtol=1e-5), \
        float(jnp.max(jnp.abs(out_f32 - ref)))

    print("KERNEL_OK")
</pallas_src>

<mosaic_0001>
module attributes {stable_mosaic.version = 11 : i64} {
  func.func @classifier_kernel(%arg0: i32, %arg1: memref<2x4096xbf16, #tpu.memory_space<vmem>>, %arg2: memref<4096x10xbf16, #tpu.memory_space<vmem>>, %arg3: memref<1x10xf32, #tpu.memory_space<vmem>>, %arg4: memref<2x10xf32, #tpu.memory_space<vmem>>) attributes {dimension_semantics = [#tpu.dimension_semantics<parallel>], iteration_bounds = array<i64: 1>, scalar_prefetch = 0 : i64, scratch_operands = 0 : i64, tpu.core_type = #tpu.core_type<tc>, window_params = [{transform_indices = @transform_0, window_bounds = array<i64: 2, 4096>}, {pipeline_mode = #tpu.pipeline_mode<synchronous>, transform_indices = @transform_1, window_bounds = array<i64: 4096, 10>}, {pipeline_mode = #tpu.pipeline_mode<synchronous>, transform_indices = @transform_2, window_bounds = array<i64: 1, 10>}, {transform_indices = @transform_3, window_bounds = array<i64: 2, 10>}]} {
    %c0 = arith.constant 0 : index
    %c0_0 = arith.constant 0 : index
    %0 = vector.load %arg1[%c0, %c0_0] : memref<2x4096xbf16, #tpu.memory_space<vmem>>, vector<2x4096xbf16>
    %c0_1 = arith.constant 0 : index
    %c0_2 = arith.constant 0 : index
    %1 = vector.load %arg2[%c0_1, %c0_2] : memref<4096x10xbf16, #tpu.memory_space<vmem>>, vector<4096x10xbf16>
    %cst = arith.constant dense<0.000000e+00> : vector<2x10xf32>
    %2 = tpu.matmul %0, %1, %cst {dimension_numbers = #tpu.dot_dimension_numbers<[1], [0], [0], [1], [0, 0, 1, 1], [], []>} : vector<2x4096xbf16>, vector<4096x10xbf16>, vector<2x10xf32> -> vector<2x10xf32>
    %c0_3 = arith.constant 0 : index
    %c0_4 = arith.constant 0 : index
    %3 = vector.load %arg3[%c0_3, %c0_4] : memref<1x10xf32, #tpu.memory_space<vmem>>, vector<1x10xf32>
    %4 = vector.broadcast %3 : vector<1x10xf32> to vector<2x10xf32>
    %5 = arith.addf %2, %4 : vector<2x10xf32>
    %cst_5 = arith.constant dense<0xFF800000> : vector<2xf32>
    %6 = vector.multi_reduction <maximumf>, %5, %cst_5 [1] : vector<2x10xf32> to vector<2xf32>
    %7 = vector.shape_cast %6 : vector<2xf32> to vector<2x1xf32>
    %8 = vector.broadcast %7 : vector<2x1xf32> to vector<2x10xf32>
    %9 = arith.subf %5, %8 : vector<2x10xf32>
    %10 = math.exp %9 : vector<2x10xf32>
    %cst_6 = arith.constant dense<0.000000e+00> : vector<2xf32>
    %11 = vector.multi_reduction <add>, %10, %cst_6 [1] : vector<2x10xf32> to vector<2xf32>
    %12 = vector.shape_cast %11 : vector<2xf32> to vector<2x1xf32>
    %13 = math.log %12 : vector<2x1xf32>
    %14 = vector.broadcast %13 : vector<2x1xf32> to vector<2x10xf32>
    %15 = arith.subf %9, %14 : vector<2x10xf32>
    %c0_7 = arith.constant 0 : index
    %c0_8 = arith.constant 0 : index
    %16 = vector.load %arg4[%c0_7, %c0_8] : memref<2x10xf32, #tpu.memory_space<vmem>>, vector<2x10xf32>
    tpu.vector_store %arg4[%c0_7, %c0_8], %15 {strides = array<i32>} : memref<2x10xf32, #tpu.memory_space<vmem>>, vector<2x10xf32>,
    return
  }
  func.func @transform_0(%arg0: i32) -> (i32, i32) {
    %c0_i32 = arith.constant 0 : i32
    %c0_i32_0 = arith.constant 0 : i32
    return %arg0, %c0_i32 : i32, i32
  }
  func.func @transform_1(%arg0: i32) -> (i32, i32) {
    %c0_i32 = arith.constant 0 : i32
    %c0_i32_0 = arith.constant 0 : i32
    %c0_i32_1 = arith.constant 0 : i32
    return %c0_i32, %c0_i32_0 : i32, i32
  }
  func.func @transform_2(%arg0: i32) -> (i32, i32) {
    %c0_i32 = arith.constant 0 : i32
    %c0_i32_0 = arith.constant 0 : i32
    %c0_i32_1 = arith.constant 0 : i32
    return %c0_i32, %c0_i32_0 : i32, i32
  }
  func.func @transform_3(%arg0: i32) -> (i32, i32) {
    %c0_i32 = arith.constant 0 : i32
    %c0_i32_0 = arith.constant 0 : i32
    return %arg0, %c0_i32 : i32, i32
  }
}

</mosaic_0001>

<llo_original>
// kernel: forward.1
$region0: #{forward.1}
  #allocation0 [shape = 'u32[]', space=smem, size = 0x4, offset = 0x4, fixed_abs, tag = 'smem constant byte address 0x4 - core index']
  #allocation1 [shape = 'u32[144,128]{1,0:T(1,128)}', space=vmem, size = 0x12000, scoped, tag = 'internal scratch']
  %s0 = inlined_call_operand.vmem [shape: bf16[2,4096], index: 0, kind: input, shape index: {}]
  %s1 = inlined_call_operand.hbm [shape: bf16[4096,10], index: 1, kind: input, shape index: {}]
  %s2 = inlined_call_operand.vmem [shape: f32[1,10], index: 2, kind: input, shape index: {}]
  %s3 = inlined_call_operand.hbm [shape: f32[2,10], index: 3, kind: output, shape index: {}]
  %s4 = sld [smem:[#allocation0]]
  $region26: #{forward.1} parent=0
    _
  %s6 = ssub.s32 1, %s4
  %s7 = scalar_select 0, %s6, %s4
  $region1: #{forward.1} parent=0
    #allocation2 [shape = 'u8[1048576]{0}', space=vmem, size = 0x100000, scoped, tag = 'input window, operand 1, single buffered']
    #allocation3 [shape = 's32[1]{0}', space=sflag, size = 0x4, scoped, tag = 'scoped memory for forward.1']
    #allocation4 [shape = 's32[1]{0}', space=sflag, size = 0x4, scoped, tag = 'scoped memory for forward.1']
    #allocation5 [shape = 'u8[1024]{0}', space=vmem, size = 0x400, scoped, tag = 'output window, operand 0, single buffered']
    %8 = vsyncpa [#allocation3], 0
    %9 = vsyncpa [#allocation4], 0
    // Predicated region
    $region2: #{forward.1} parent=1 // pred_check
      _
    $region3: #{forward.1} parent=1 // pred_check_branch
      %11 = sbr.rel (0) target = $region5
    $region4: #{forward.1} parent=1 // pred_region
      _
    $region5: #{forward.1} parent=1 // pred_fallthru
      _
    // Predicated region
    $region6: #{forward.1} parent=1 // pred_check
      _
    $region7: #{forward.1} parent=1 // pred_check_branch
      %13 = sbr.rel (0) target = $region9
    $region8: #{forward.1} parent=1 // pred_region
      %s15 = ssub.s32 32768, 32768
      %16 = vsyncadd [#allocation3], %s15
      %s17 = sshll.u32 [#allocation2], 4
      %s18 = int_to_ptr.vmem [resolvable:$true] %s17
      %23 = dma.hbm_to_vmem [thread:$0]  %s1, 32768, %s18, [#allocation3], 64, 64, 4
    $region9: #{forward.1} parent=1 // pred_fallthru
      _
    // Predicated region
    $region10: #{forward.1} parent=1 // pred_check
      _
    $region11: #{forward.1} parent=1 // pred_check_branch
      %25 = sbr.rel (0) target = $region13
    $region12: #{forward.1} parent=1 // pred_region
      _
    $region13: #{forward.1} parent=1 // pred_fallthru
      _
    // Predicated region
    $region14: #{forward.1} parent=1 // pred_check
      _
    $region15: #{forward.1} parent=1 // pred_check_branch
      %27 = sbr.rel (0) target = $region17
    $region16: #{forward.1} parent=1 // pred_region
      %28 = dma.done [#allocation3], 32768
    $region17: #{forward.1} parent=1 // pred_fallthru
      _
    %v30 = vld [vmem:[%s0] sm:$0xff]
    %v31 = vld [vmem:[%s0 + $0x8] sm:$0xff]
    %v32 = vld [vmem:[%s0 + $0x10] sm:$0xff]
    %v33 = vld [vmem:[%s0 + $0x18] sm:$0xff]
    %v34 = vld [vmem:[#allocation2] sm:$0xf]
    %v35 = vld [vmem:[#allocation2 + $0x4] sm:$0xf]
    %v36 = vld [vmem:[#allocation2 + $0x8] sm:$0xf]
    %v37 = vld [vmem:[#allocation2 + $0xc] sm:$0xf]
    %v38 = vld [vmem:[#allocation2 + $0x10] sm:$0xf]
    %v39 = vld [vmem:[#allocation2 + $0x14] sm:$0xf]
    %v40 = vld [vmem:[#allocation2 + $0x18] sm:$0xf]
    %v41 = vld [vmem:[#allocation2 + $0x1c] sm:$0xf]
    %v42 = vld [vmem:[#allocation2 + $0x20] sm:$0xf]
    %v43 = vld [vmem:[#allocation2 + $0x24] sm:$0xf]
    %v44 = vld [vmem:[#allocation2 + $0x28] sm:$0xf]
    %v45 = vld [vmem:[#allocation2 + $0x2c] sm:$0xf]
    %v46 = vld [vmem:[#allocation2 + $0x30] sm:$0xf]
    %v47 = vld [vmem:[#allocation2 + $0x34] sm:$0xf]
    %v48 = vld [vmem:[#allocation2 + $0x38] sm:$0xf]
    %v49 = vld [vmem:[#allocation2 + $0x3c] sm:$0xf]
    %v50 = vld [vmem:[#allocation2 + $0x40] sm:$0xf]
    %v51 = vld [vmem:[#allocation2 + $0x44] sm:$0xf]
    %v52 = vld [vmem:[#allocation2 + $0x48] sm:$0xf]
    %v53 = vld [vmem:[#allocation2 + $0x4c] sm:$0xf]
    %v54 = vld [vmem:[#allocation2 + $0x50] sm:$0xf]
    %v55 = vld [vmem:[#allocation2 + $0x54] sm:$0xf]
    %v56 = vld [vmem:[#allocation2 + $0x58] sm:$0xf]
    %v57 = vld [vmem:[#allocation2 + $0x5c] sm:$0xf]
    %v58 = vld [vmem:[#allocation2 + $0x60] sm:$0xf]
    %v59 = vld [vmem:[#allocation2 + $0x64] sm:$0xf]
    %v60 = vld [vmem:[#allocation2 + $0x68] sm:$0xf]
    %v61 = vld [vmem:[#allocation2 + $0x6c] sm:$0xf]
    %v62 = vld [vmem:[#allocation2 + $0x70] sm:$0xf]
    %v63 = vld [vmem:[#allocation2 + $0x74] sm:$0xf]
    %v64 = vld [vmem:[#allocation2 + $0x78] sm:$0xf]
    %v65 = vld [vmem:[#allocation2 + $0x7c] sm:$0xf]
    %v66 = vld [vmem:[#allocation2 + $0x80] sm:$0xf]
    %v67 = vld [vmem:[#allocation2 + $0x84] sm:$0xf]
    %v68 = vld [vmem:[#allocation2 + $0x88] sm:$0xf]
    %v69 = vld [vmem:[#allocation2 + $0x8c] sm:$0xf]
    %v70 = vld [vmem:[#allocation2 + $0x90] sm:$0xf]
    %v71 = vld [vmem:[#allocation2 + $0x94] sm:$0xf]
    %v72 = vld [vmem:[#allocation2 + $0x98] sm:$0xf]
    %v73 = vld [vmem:[#allocation2 + $0x9c] sm:$0xf]
    %v74 = vld [vmem:[#allocation2 + $0xa0] sm:$0xf]
    %v75 = vld [vmem:[#allocation2 + $0xa4] sm:$0xf]
    %v76 = vld [vmem:[#allocation2 + $0xa8] sm:$0xf]
    %v77 = vld [vmem:[#allocation2 + $0xac] sm:$0xf]
    %v78 = vld [vmem:[#allocation2 + $0xb0] sm:$0xf]
    %v79 = vld [vmem:[#allocation2 + $0xb4] sm:$0xf]
    %v80 = vld [vmem:[#allocation2 + $0xb8] sm:$0xf]
    %v81 = vld [vmem:[#allocation2 + $0xbc] sm:$0xf]
    %v82 = vld [vmem:[#allocation2 + $0xc0] sm:$0xf]
    %v83 = vld [vmem:[#allocation2 + $0xc4] sm:$0xf]
    %v84 = vld [vmem:[#allocation2 + $0xc8] sm:$0xf]
    %v85 = vld [vmem:[#allocation2 + $0xcc] sm:$0xf]
    %v86 = vld [vmem:[#allocation2 + $0xd0] sm:$0xf]
    %v87 = vld [vmem:[#allocation2 + $0xd4] sm:$0xf]
    %v88 = vld [vmem:[#allocation2 + $0xd8] sm:$0xf]
    %v89 = vld [vmem:[#allocation2 + $0xdc] sm:$0xf]
    %v90 = vld [vmem:[#allocation2 + $0xe0] sm:$0xf]
    %v91 = vld [vmem:[#allocation2 + $0xe4] sm:$0xf]
    %v92 = vld [vmem:[#allocation2 + $0xe8] sm:$0xf]
    %v93 = vld [vmem:[#allocation2 + $0xec] sm:$0xf]
    %v94 = vld [vmem:[#allocation2 + $0xf0] sm:$0xf]
    %v95 = vld [vmem:[#allocation2 + $0xf4] sm:$0xf]
    %v96 = vld [vmem:[#allocation2 + $0xf8] sm:$0xf]
    %v97 = vld [vmem:[#allocation2 + $0xfc] sm:$0xf]
    %v98 = vld [vmem:[#allocation2 + $0x100] sm:$0xf]
    %v99 = vld [vmem:[#allocation2 + $0x104] sm:$0xf]
    %v100 = vld [vmem:[#allocation2 + $0x108] sm:$0xf]
    %v101 = vld [vmem:[#allocation2 + $0x10c] sm:$0xf]
    %v102 = vld [vmem:[#allocation2 + $0x110] sm:$0xf]
    %v103 = vld [vmem:[#allocation2 + $0x114] sm:$0xf]
    %v104 = vld [vmem:[#allocation2 + $0x118] sm:$0xf]
    %v105 = vld [vmem:[#allocation2 + $0x11c] sm:$0xf]
    %v106 = vld [vmem:[#allocation2 + $0x120] sm:$0xf]
    %v107 = vld [vmem:[#allocation2 + $0x124] sm:$0xf]
    %v108 = vld [vmem:[#allocation2 + $0x128] sm:$0xf]
    %v109 = vld [vmem:[#allocation2 + $0x12c] sm:$0xf]
    %v110 = vld [vmem:[#allocation2 + $0x130] sm:$0xf]
    %v111 = vld [vmem:[#allocation2 + $0x134] sm:$0xf]
    %v112 = vld [vmem:[#allocation2 + $0x138] sm:$0xf]
    %v113 = vld [vmem:[#allocation2 + $0x13c] sm:$0xf]
    %v114 = vld [vmem:[#allocation2 + $0x140] sm:$0xf]
    %v115 = vld [vmem:[#allocation2 + $0x144] sm:$0xf]
    %v116 = vld [vmem:[#allocation2 + $0x148] sm:$0xf]
    %v117 = vld [vmem:[#allocation2 + $0x14c] sm:$0xf]
    %v118 = vld [vmem:[#allocation2 + $0x150] sm:$0xf]
    %v119 = vld [vmem:[#allocation2 + $0x154] sm:$0xf]
    %v120 = vld [vmem:[#allocation2 + $0x158] sm:$0xf]
    %v121 = vld [vmem:[#allocation2 + $0x15c] sm:$0xf]
    %v122 = vld [vmem:[#allocation2 + $0x160] sm:$0xf]
    %v123 = vld [vmem:[#allocation2 + $0x164] sm:$0xf]
    %v124 = vld [vmem:[#allocation2 + $0x168] sm:$0xf]
    %v125 = vld [vmem:[#allocation2 + $0x16c] sm:$0xf]
    %v126 = vld [vmem:[#allocation2 + $0x170] sm:$0xf]
    %v127 = vld [vmem:[#allocation2 + $0x174] sm:$0xf]
    %v128 = vld [vmem:[#allocation2 + $0x178] sm:$0xf]
    %v129 = vld [vmem:[#allocation2 + $0x17c] sm:$0xf]
    %v130 = vld [vmem:[#allocation2 + $0x180] sm:$0xf]
    %v131 = vld [vmem:[#allocation2 + $0x184] sm:$0xf]
    %v132 = vld [vmem:[#allocation2 + $0x188] sm:$0xf]
    %v133 = vld [vmem:[#allocation2 + $0x18c] sm:$0xf]
    %v134 = vld [vmem:[#allocation2 + $0x190] sm:$0xf]
    %v135 = vld [vmem:[#allocation2 + $0x194] sm:$0xf]
    %v136 = vld [vmem:[#allocation2 + $0x198] sm:$0xf]
    %v137 = vld [vmem:[#allocation2 + $0x19c] sm:$0xf]
    %v138 = vld [vmem:[#allocation2 + $0x1a0] sm:$0xf]
    %v139 = vld [vmem:[#allocation2 + $0x1a4] sm:$0xf]
    %v140 = vld [vmem:[#allocation2 + $0x1a8] sm:$0xf]
    %v141 = vld [vmem:[#allocation2 + $0x1ac] sm:$0xf]
    %v142 = vld [vmem:[#allocation2 + $0x1b0] sm:$0xf]
    %v143 = vld [vmem:[#allocation2 + $0x1b4] sm:$0xf]
    %v144 = vld [vmem:[#allocation2 + $0x1b8] sm:$0xf]
    %v145 = vld [vmem:[#allocation2 + $0x1bc] sm:$0xf]
    %v146 = vld [vmem:[#allocation2 + $0x1c0] sm:$0xf]
    %v147 = vld [vmem:[#allocation2 + $0x1c4] sm:$0xf]
    %v148 = vld [vmem:[#allocation2 + $0x1c8] sm:$0xf]
    %v149 = vld [vmem:[#allocation2 + $0x1cc] sm:$0xf]
    %v150 = vld [vmem:[#allocation2 + $0x1d0] sm:$0xf]
    %v151 = vld [vmem:[#allocation2 + $0x1d4] sm:$0xf]
    %v152 = vld [vmem:[#allocation2 + $0x1d8] sm:$0xf]
    %v153 = vld [vmem:[#allocation2 + $0x1dc] sm:$0xf]
    %v154 = vld [vmem:[#allocation2 + $0x1e0] sm:$0xf]
    %v155 = vld [vmem:[#allocation2 + $0x1e4] sm:$0xf]
    %v156 = vld [vmem:[#allocation2 + $0x1e8] sm:$0xf]
    %v157 = vld [vmem:[#allocation2 + $0x1ec] sm:$0xf]
    %v158 = vld [vmem:[#allocation2 + $0x1f0] sm:$0xf]
    %v159 = vld [vmem:[#allocation2 + $0x1f4] sm:$0xf]
    %v160 = vld [vmem:[#allocation2 + $0x1f8] sm:$0xf]
    %v161 = vld [vmem:[#allocation2 + $0x1fc] sm:$0xf]
    %v162 = vld [vmem:[#allocation2 + $0x200] sm:$0xf]
    %v163 = vld [vmem:[#allocation2 + $0x204] sm:$0xf]
    %v164 = vld [vmem:[#allocation2 + $0x208] sm:$0xf]
    %v165 = vld [vmem:[#allocation2 + $0x20c] sm:$0xf]
    %v166 = vld [vmem:[#allocation2 + $0x210] sm:$0xf]
    %v167 = vld [vmem:[#allocation2 + $0x214] sm:$0xf]
    %v168 = vld [vmem:[#allocation2 + $0x218] sm:$0xf]
    %v169 = vld [vmem:[#allocation2 + $0x21c] sm:$0xf]
    %v170 = vld [vmem:[#allocation2 + $0x220] sm:$0xf]
    %v171 = vld [vmem:[#allocation2 + $0x224] sm:$0xf]
    %v172 = vld [vmem:[#allocation2 + $0x228] sm:$0xf]
    %v173 = vld [vmem:[#allocation2 + $0x22c] sm:$0xf]
    %v174 = vld [vmem:[#allocation2 + $0x230] sm:$0xf]
    %v175 = vld [vmem:[#allocation2 + $0x234] sm:$0xf]
    %v176 = vld [vmem:[#allocation2 + $0x238] sm:$0xf]
    %v177 = vld [vmem:[#allocation2 + $0x23c] sm:$0xf]
    %v178 = vld [vmem:[#allocation2 + $0x240] sm:$0xf]
    %v179 = vld [vmem:[#allocation2 + $0x244] sm:$0xf]
    %v180 = vld [vmem:[#allocation2 + $0x248] sm:$0xf]
    %v181 = vld [vmem:[#allocation2 + $0x24c] sm:$0xf]
    %v182 = vld [vmem:[#allocation2 + $0x250] sm:$0xf]
    %v183 = vld [vmem:[#allocation2 + $0x254] sm:$0xf]
    %v184 = vld [vmem:[#allocation2 + $0x258] sm:$0xf]
    %v185 = vld [vmem:[#allocation2 + $0x25c] sm:$0xf]
    %v186 = vld [vmem:[#allocation2 + $0x260] sm:$0xf]
    %v187 = vld [vmem:[#allocation2 + $0x264] sm:$0xf]
    %v188 = vld [vmem:[#allocation2 + $0x268] sm:$0xf]
    %v189 = vld [vmem:[#allocation2 + $0x26c] sm:$0xf]
    %v190 = vld [vmem:[#allocation2 + $0x270] sm:$0xf]
    %v191 = vld [vmem:[#allocation2 + $0x274] sm:$0xf]
    %v192 = vld [vmem:[#allocation2 + $0x278] sm:$0xf]
    %v193 = vld [vmem:[#allocation2 + $0x27c] sm:$0xf]
    %v194 = vld [vmem:[#allocation2 + $0x280] sm:$0xf]
    %v195 = vld [vmem:[#allocation2 + $0x284] sm:$0xf]
    %v196 = vld [vmem:[#allocation2 + $0x288] sm:$0xf]
    %v197 = vld [vmem:[#allocation2 + $0x28c] sm:$0xf]
    %v198 = vld [vmem:[#allocation2 + $0x290] sm:$0xf]
    %v199 = vld [vmem:[#allocation2 + $0x294] sm:$0xf]
    %v200 = vld [vmem:[#allocation2 + $0x298] sm:$0xf]
    %v201 = vld [vmem:[#allocation2 + $0x29c] sm:$0xf]
    %v202 = vld [vmem:[#allocation2 + $0x2a0] sm:$0xf]
    %v203 = vld [vmem:[#allocation2 + $0x2a4] sm:$0xf]
    %v204 = vld [vmem:[#allocation2 + $0x2a8] sm:$0xf]
    %v205 = vld [vmem:[#allocation2 + $0x2ac] sm:$0xf]
    %v206 = vld [vmem:[#allocation2 + $0x2b0] sm:$0xf]
    %v207 = vld [vmem:[#allocation2 + $0x2b4] sm:$0xf]
    %v208 = vld [vmem:[#allocation2 + $0x2b8] sm:$0xf]
    %v209 = vld [vmem:[#allocation2 + $0x2bc] sm:$0xf]
    %v210 = vld [vmem:[#allocation2 + $0x2c0] sm:$0xf]
    %v211 = vld [vmem:[#allocation2 + $0x2c4] sm:$0xf]
    %v212 = vld [vmem:[#allocation2 + $0x2c8] sm:$0xf]
    %v213 = vld [vmem:[#allocation2 + $0x2cc] sm:$0xf]
    %v214 = vld [vmem:[#allocation2 + $0x2d0] sm:$0xf]
    %v215 = vld [vmem:[#allocation2 + $0x2d4] sm:$0xf]
    %v216 = vld [vmem:[#allocation2 + $0x2d8] sm:$0xf]
    %v217 = vld [vmem:[#allocation2 + $0x2dc] sm:$0xf]
    %v218 = vld [vmem:[#allocation2 + $0x2e0] sm:$0xf]
    %v219 = vld [vmem:[#allocation2 + $0x2e4] sm:$0xf]
    %v220 = vld [vmem:[#allocation2 + $0x2e8] sm:$0xf]
    %v221 = vld [vmem:[#allocation2 + $0x2ec] sm:$0xf]
    %v222 = vld [vmem:[#allocation2 + $0x2f0] sm:$0xf]
    %v223 = vld [vmem:[#allocation2 + $0x2f4] sm:$0xf]
    %v224 = vld [vmem:[#allocation2 + $0x2f8] sm:$0xf]
    %v225 = vld [vmem:[#allocation2 + $0x2fc] sm:$0xf]
    %v226 = vld [vmem:[#allocation2 + $0x300] sm:$0xf]
    %v227 = vld [vmem:[#allocation2 + $0x304] sm:$0xf]
    %v228 = vld [vmem:[#allocation2 + $0x308] sm:$0xf]
    %v229 = vld [vmem:[#allocation2 + $0x30c] sm:$0xf]
    %v230 = vld [vmem:[#allocation2 + $0x310] sm:$0xf]
    %v231 = vld [vmem:[#allocation2 + $0x314] sm:$0xf]
    %v232 = vld [vmem:[#allocation2 + $0x318] sm:$0xf]
    %v233 = vld [vmem:[#allocation2 + $0x31c] sm:$0xf]
    %v234 = vld [vmem:[#allocation2 + $0x320] sm:$0xf]
    %v235 = vld [vmem:[#allocation2 + $0x324] sm:$0xf]
    %v236 = vld [vmem:[#allocation2 + $0x328] sm:$0xf]
    %v237 = vld [vmem:[#allocation2 + $0x32c] sm:$0xf]
    %v238 = vld [vmem:[#allocation2 + $0x330] sm:$0xf]
    %v239 = vld [vmem:[#allocation2 + $0x334] sm:$0xf]
    %v240 = vld [vmem:[#allocation2 + $0x338] sm:$0xf]
    %v241 = vld [vmem:[#allocation2 + $0x33c] sm:$0xf]
    %v242 = vld [vmem:[#allocation2 + $0x340] sm:$0xf]
    %v243 = vld [vmem:[#allocation2 + $0x344] sm:$0xf]
    %v244 = vld [vmem:[#allocation2 + $0x348] sm:$0xf]
    %v245 = vld [vmem:[#allocation2 + $0x34c] sm:$0xf]
    %v246 = vld [vmem:[#allocation2 + $0x350] sm:$0xf]
    %v247 = vld [vmem:[#allocation2 + $0x354] sm:$0xf]
    %v248 = vld [vmem:[#allocation2 + $0x358] sm:$0xf]
    %v249 = vld [vmem:[#allocation2 + $0x35c] sm:$0xf]
    %v250 = vld [vmem:[#allocation2 + $0x360] sm:$0xf]
    %v251 = vld [vmem:[#allocation2 + $0x364] sm:$0xf]
    %v252 = vld [vmem:[#allocation2 + $0x368] sm:$0xf]
    %v253 = vld [vmem:[#allocation2 + $0x36c] sm:$0xf]
    %v254 = vld [vmem:[#allocation2 + $0x370] sm:$0xf]
    %v255 = vld [vmem:[#allocation2 + $0x374] sm:$0xf]
    %v256 = vld [vmem:[#allocation2 + $0x378] sm:$0xf]
    %v257 = vld [vmem:[#allocation2 + $0x37c] sm:$0xf]
    %v258 = vld [vmem:[#allocation2 + $0x380] sm:$0xf]
    %v259 = vld [vmem:[#allocation2 + $0x384] sm:$0xf]
    %v260 = vld [vmem:[#allocation2 + $0x388] sm:$0xf]
    %v261 = vld [vmem:[#allocation2 + $0x38c] sm:$0xf]
    %v262 = vld [vmem:[#allocation2 + $0x390] sm:$0xf]
    %v263 = vld [vmem:[#allocation2 + $0x394] sm:$0xf]
    %v264 = vld [vmem:[#allocation2 + $0x398] sm:$0xf]
    %v265 = vld [vmem:[#allocation2 + $0x39c] sm:$0xf]
    %v266 = vld [vmem:[#allocation2 + $0x3a0] sm:$0xf]
    %v267 = vld [vmem:[#allocation2 + $0x3a4] sm:$0xf]
    %v268 = vld [vmem:[#allocation2 + $0x3a8] sm:$0xf]
    %v269 = vld [vmem:[#allocation2 + $0x3ac] sm:$0xf]
    %v270 = vld [vmem:[#allocation2 + $0x3b0] sm:$0xf]
    %v271 = vld [vmem:[#allocation2 + $0x3b4] sm:$0xf]
    %v272 = vld [vmem:[#allocation2 + $0x3b8] sm:$0xf]
    %v273 = vld [vmem:[#allocation2 + $0x3bc] sm:$0xf]
    %v274 = vld [vmem:[#allocation2 + $0x3c0] sm:$0xf]
    %v275 = vld [vmem:[#allocation2 + $0x3c4] sm:$0xf]
    %v276 = vld [vmem:[#allocation2 + $0x3c8] sm:$0xf]
    %v277 = vld [vmem:[#allocation2 + $0x3cc] sm:$0xf]
    %v278 = vld [vmem:[#allocation2 + $0x3d0] sm:$0xf]
    %v279 = vld [vmem:[#allocation2 + $0x3d4] sm:$0xf]
    %v280 = vld [vmem:[#allocation2 + $0x3d8] sm:$0xf]
    %v281 = vld [vmem:[#allocation2 + $0x3dc] sm:$0xf]
    %v282 = vld [vmem:[#allocation2 + $0x3e0] sm:$0xf]
    %v283 = vld [vmem:[#allocation2 + $0x3e4] sm:$0xf]
    %v284 = vld [vmem:[#allocation2 + $0x3e8] sm:$0xf]
    %v285 = vld [vmem:[#allocation2 + $0x3ec] sm:$0xf]
    %v286 = vld [vmem:[#allocation2 + $0x3f0] sm:$0xf]
    %v287 = vld [vmem:[#allocation2 + $0x3f4] sm:$0xf]
    %v288 = vld [vmem:[#allocation2 + $0x3f8] sm:$0xf]
    %v289 = vld [vmem:[#allocation2 + $0x3fc] sm:$0xf]
    %v290 = vld [vmem:[#allocation2 + $0x400] sm:$0xf]
    %v291 = vld [vmem:[#allocation2 + $0x404] sm:$0xf]
    %v292 = vld [vmem:[#allocation2 + $0x408] sm:$0xf]
    %v293 = vld [vmem:[#allocation2 + $0x40c] sm:$0xf]
    %v294 = vld [vmem:[#allocation2 + $0x410] sm:$0xf]
    %v295 = vld [vmem:[#allocation2 + $0x414] sm:$0xf]
    %v296 = vld [vmem:[#allocation2 + $0x418] sm:$0xf]
    %v297 = vld [vmem:[#allocation2 + $0x41c] sm:$0xf]
    %v298 = vld [vmem:[#allocation2 + $0x420] sm:$0xf]
    %v299 = vld [vmem:[#allocation2 + $0x424] sm:$0xf]
    %v300 = vld [vmem:[#allocation2 + $0x428] sm:$0xf]
    %v301 = vld [vmem:[#allocation2 + $0x42c] sm:$0xf]
    %v302 = vld [vmem:[#allocation2 + $0x430] sm:$0xf]
    %v303 = vld [vmem:[#allocation2 + $0x434] sm:$0xf]
    %v304 = vld [vmem:[#allocation2 + $0x438] sm:$0xf]
    %v305 = vld [vmem:[#allocation2 + $0x43c] sm:$0xf]
    %v306 = vld [vmem:[#allocation2 + $0x440] sm:$0xf]
    %v307 = vld [vmem:[#allocation2 + $0x444] sm:$0xf]
    %v308 = vld [vmem:[#allocation2 + $0x448] sm:$0xf]
    %v309 = vld [vmem:[#allocation2 + $0x44c] sm:$0xf]
    %v310 = vld [vmem:[#allocation2 + $0x450] sm:$0xf]
    %v311 = vld [vmem:[#allocation2 + $0x454] sm:$0xf]
    %v312 = vld [vmem:[#allocation2 + $0x458] sm:$0xf]
    %v313 = vld [vmem:[#allocation2 + $0x45c] sm:$0xf]
    %v314 = vld [vmem:[#allocation2 + $0x460] sm:$0xf]
    %v315 = vld [vmem:[#allocation2 + $0x464] sm:$0xf]
    %v316 = vld [vmem:[#allocation2 + $0x468] sm:$0xf]
    %v317 = vld [vmem:[#allocation2 + $0x46c] sm:$0xf]
    %v318 = vld [vmem:[#allocation2 + $0x470] sm:$0xf]
    %v319 = vld [vmem:[#allocation2 + $0x474] sm:$0xf]
    %v320 = vld [vmem:[#allocation2 + $0x478] sm:$0xf]
    %v321 = vld [vmem:[#allocation2 + $0x47c] sm:$0xf]
    %v322 = vld [vmem:[#allocation2 + $0x480] sm:$0xf]
    %v323 = vld [vmem:[#allocation2 + $0x484] sm:$0xf]
    %v324 = vld [vmem:[#allocation2 + $0x488] sm:$0xf]
    %v325 = vld [vmem:[#allocation2 + $0x48c] sm:$0xf]
    %v326 = vld [vmem:[#allocation2 + $0x490] sm:$0xf]
    %v327 = vld [vmem:[#allocation2 + $0x494] sm:$0xf]
    %v328 = vld [vmem:[#allocation2 + $0x498] sm:$0xf]
    %v329 = vld [vmem:[#allocation2 + $0x49c] sm:$0xf]
    %v330 = vld [vmem:[#allocation2 + $0x4a0] sm:$0xf]
    %v331 = vld [vmem:[#allocation2 + $0x4a4] sm:$0xf]
    %v332 = vld [vmem:[#allocation2 + $0x4a8] sm:$0xf]
    %v333 = vld [vmem:[#allocation2 + $0x4ac] sm:$0xf]
    %v334 = vld [vmem:[#allocation2 + $0x4b0] sm:$0xf]
    %v335 = vld [vmem:[#allocation2 + $0x4b4] sm:$0xf]
    %v336 = vld [vmem:[#allocation2 + $0x4b8] sm:$0xf]
    %v337 = vld [vmem:[#allocation2 + $0x4bc] sm:$0xf]
    %v338 = vld [vmem:[#allocation2 + $0x4c0] sm:$0xf]
    %v339 = vld [vmem:[#allocation2 + $0x4c4] sm:$0xf]
    %v340 = vld [vmem:[#allocation2 + $0x4c8] sm:$0xf]
    %v341 = vld [vmem:[#allocation2 + $0x4cc] sm:$0xf]
    %v342 = vld [vmem:[#allocation2 + $0x4d0] sm:$0xf]
    %v343 = vld [vmem:[#allocation2 + $0x4d4] sm:$0xf]
    %v344 = vld [vmem:[#allocation2 + $0x4d8] sm:$0xf]
    %v345 = vld [vmem:[#allocation2 + $0x4dc] sm:$0xf]
    %v346 = vld [vmem:[#allocation2 + $0x4e0] sm:$0xf]
    %v347 = vld [vmem:[#allocation2 + $0x4e4] sm:$0xf]
    %v348 = vld [vmem:[#allocation2 + $0x4e8] sm:$0xf]
    %v349 = vld [vmem:[#allocation2 + $0x4ec] sm:$0xf]
    %v350 = vld [vmem:[#allocation2 + $0x4f0] sm:$0xf]
    %v351 = vld [vmem:[#allocation2 + $0x4f4] sm:$0xf]
    %v352 = vld [vmem:[#allocation2 + $0x4f8] sm:$0xf]
    %v353 = vld [vmem:[#allocation2 + $0x4fc] sm:$0xf]
    %v354 = vld [vmem:[#allocation2 + $0x500] sm:$0xf]
    %v355 = vld [vmem:[#allocation2 + $0x504] sm:$0xf]
    %v356 = vld [vmem:[#allocation2 + $0x508] sm:$0xf]
    %v357 = vld [vmem:[#allocation2 + $0x50c] sm:$0xf]
    %v358 = vld [vmem:[#allocation2 + $0x510] sm:$0xf]
    %v359 = vld [vmem:[#allocation2 + $0x514] sm:$0xf]
    %v360 = vld [vmem:[#allocation2 + $0x518] sm:$0xf]
    %v361 = vld [vmem:[#allocation2 + $0x51c] sm:$0xf]
    %v362 = vld [vmem:[#allocation2 + $0x520] sm:$0xf]
    %v363 = vld [vmem:[#allocation2 + $0x524] sm:$0xf]
    %v364 = vld [vmem:[#allocation2 + $0x528] sm:$0xf]
    %v365 = vld [vmem:[#allocation2 + $0x52c] sm:$0xf]
    %v366 = vld [vmem:[#allocation2 + $0x530] sm:$0xf]
    %v367 = vld [vmem:[#allocation2 + $0x534] sm:$0xf]
    %v368 = vld [vmem:[#allocation2 + $0x538] sm:$0xf]
    %v369 = vld [vmem:[#allocation2 + $0x53c] sm:$0xf]
    %v370 = vld [vmem:[#allocation2 + $0x540] sm:$0xf]
    %v371 = vld [vmem:[#allocation2 + $0x544] sm:$0xf]
    %v372 = vld [vmem:[#allocation2 + $0x548] sm:$0xf]
    %v373 = vld [vmem:[#allocation2 + $0x54c] sm:$0xf]
    %v374 = vld [vmem:[#allocation2 + $0x550] sm:$0xf]
    %v375 = vld [vmem:[#allocation2 + $0x554] sm:$0xf]
    %v376 = vld [vmem:[#allocation2 + $0x558] sm:$0xf]
    %v377 = vld [vmem:[#allocation2 + $0x55c] sm:$0xf]
    %v378 = vld [vmem:[#allocation2 + $0x560] sm:$0xf]
    %v379 = vld [vmem:[#allocation2 + $0x564] sm:$0xf]
    %v380 = vld [vmem:[#allocation2 + $0x568] sm:$0xf]
    %v381 = vld [vmem:[#allocation2 + $0x56c] sm:$0xf]
    %v382 = vld [vmem:[#allocation2 + $0x570] sm:$0xf]
    %v383 = vld [vmem:[#allocation2 + $0x574] sm:$0xf]
    %v384 = vld [vmem:[#allocation2 + $0x578] sm:$0xf]
    %v385 = vld [vmem:[#allocation2 + $0x57c] sm:$0xf]
    %v386 = vld [vmem:[#allocation2 + $0x580] sm:$0xf]
    %v387 = vld [vmem:[#allocation2 + $0x584] sm:$0xf]
    %v388 = vld [vmem:[#allocation2 + $0x588] sm:$0xf]
    %v389 = vld [vmem:[#allocation2 + $0x58c] sm:$0xf]
    %v390 = vld [vmem:[#allocation2 + $0x590] sm:$0xf]
    %v391 = vld [vmem:[#allocation2 + $0x594] sm:$0xf]
    %v392 = vld [vmem:[#allocation2 + $0x598] sm:$0xf]
    %v393 = vld [vmem:[#allocation2 + $0x59c] sm:$0xf]
    %v394 = vld [vmem:[#allocation2 + $0x5a0] sm:$0xf]
    %v395 = vld [vmem:[#allocation2 + $0x5a4] sm:$0xf]
    %v396 = vld [vmem:[#allocation2 + $0x5a8] sm:$0xf]
    %v397 = vld [vmem:[#allocation2 + $0x5ac] sm:$0xf]
    %v398 = vld [vmem:[#allocation2 + $0x5b0] sm:$0xf]
    %v399 = vld [vmem:[#allocation2 + $0x5b4] sm:$0xf]
    %v400 = vld [vmem:[#allocation2 + $0x5b8] sm:$0xf]
    %v401 = vld [vmem:[#allocation2 + $0x5bc] sm:$0xf]
    %v402 = vld [vmem:[#allocation2 + $0x5c0] sm:$0xf]
    %v403 = vld [vmem:[#allocation2 + $0x5c4] sm:$0xf]
    %v404 = vld [vmem:[#allocation2 + $0x5c8] sm:$0xf]
    %v405 = vld [vmem:[#allocation2 + $0x5cc] sm:$0xf]
    %v406 = vld [vmem:[#allocation2 + $0x5d0] sm:$0xf]
    %v407 = vld [vmem:[#allocation2 + $0x5d4] sm:$0xf]
    %v408 = vld [vmem:[#allocation2 + $0x5d8] sm:$0xf]
    %v409 = vld [vmem:[#allocation2 + $0x5dc] sm:$0xf]
    %v410 = vld [vmem:[#allocation2 + $0x5e0] sm:$0xf]
    %v411 = vld [vmem:[#allocation2 + $0x5e4] sm:$0xf]
    %v412 = vld [vmem:[#allocation2 + $0x5e8] sm:$0xf]
    %v413 = vld [vmem:[#allocation2 + $0x5ec] sm:$0xf]
    %v414 = vld [vmem:[#allocation2 + $0x5f0] sm:$0xf]
    %v415 = vld [vmem:[#allocation2 + $0x5f4] sm:$0xf]
    %v416 = vld [vmem:[#allocation2 + $0x5f8] sm:$0xf]
    %v417 = vld [vmem:[#allocation2 + $0x5fc] sm:$0xf]
    %v418 = vld [vmem:[#allocation2 + $0x600] sm:$0xf]
    %v419 = vld [vmem:[#allocation2 + $0x604] sm:$0xf]
    %v420 = vld [vmem:[#allocation2 + $0x608] sm:$0xf]
    %v421 = vld [vmem:[#allocation2 + $0x60c] sm:$0xf]
    %v422 = vld [vmem:[#allocation2 + $0x610] sm:$0xf]
    %v423 = vld [vmem:[#allocation2 + $0x614] sm:$0xf]
    %v424 = vld [vmem:[#allocation2 + $0x618] sm:$0xf]
    %v425 = vld [vmem:[#allocation2 + $0x61c] sm:$0xf]
    %v426 = vld [vmem:[#allocation2 + $0x620] sm:$0xf]
    %v427 = vld [vmem:[#allocation2 + $0x624] sm:$0xf]
    %v428 = vld [vmem:[#allocation2 + $0x628] sm:$0xf]
    %v429 = vld [vmem:[#allocation2 + $0x62c] sm:$0xf]
    %v430 = vld [vmem:[#allocation2 + $0x630] sm:$0xf]
    %v431 = vld [vmem:[#allocation2 + $0x634] sm:$0xf]
    %v432 = vld [vmem:[#allocation2 + $0x638] sm:$0xf]
    %v433 = vld [vmem:[#allocation2 + $0x63c] sm:$0xf]
    %v434 = vld [vmem:[#allocation2 + $0x640] sm:$0xf]
    %v435 = vld [vmem:[#allocation2 + $0x644] sm:$0xf]
    %v436 = vld [vmem:[#allocation2 + $0x648] sm:$0xf]
    %v437 = vld [vmem:[#allocation2 + $0x64c] sm:$0xf]
    %v438 = vld [vmem:[#allocation2 + $0x650] sm:$0xf]
    %v439 = vld [vmem:[#allocation2 + $0x654] sm:$0xf]
    %v440 = vld [vmem:[#allocation2 + $0x658] sm:$0xf]
    %v441 = vld [vmem:[#allocation2 + $0x65c] sm:$0xf]
    %v442 = vld [vmem:[#allocation2 + $0x660] sm:$0xf]
    %v443 = vld [vmem:[#allocation2 + $0x664] sm:$0xf]
    %v444 = vld [vmem:[#allocation2 + $0x668] sm:$0xf]
    %v445 = vld [vmem:[#allocation2 + $0x66c] sm:$0xf]
    %v446 = vld [vmem:[#allocation2 + $0x670] sm:$0xf]
    %v447 = vld [vmem:[#allocation2 + $0x674] sm:$0xf]
    %v448 = vld [vmem:[#allocation2 + $0x678] sm:$0xf]
    %v449 = vld [vmem:[#allocation2 + $0x67c] sm:$0xf]
    %v450 = vld [vmem:[#allocation2 + $0x680] sm:$0xf]
    %v451 = vld [vmem:[#allocation2 + $0x684] sm:$0xf]
    %v452 = vld [vmem:[#allocation2 + $0x688] sm:$0xf]
    %v453 = vld [vmem:[#allocation2 + $0x68c] sm:$0xf]
    %v454 = vld [vmem:[#allocation2 + $0x690] sm:$0xf]
    %v455 = vld [vmem:[#allocation2 + $0x694] sm:$0xf]
    %v456 = vld [vmem:[#allocation2 + $0x698] sm:$0xf]
    %v457 = vld [vmem:[#allocation2 + $0x69c] sm:$0xf]
    %v458 = vld [vmem:[#allocation2 + $0x6a0] sm:$0xf]
    %v459 = vld [vmem:[#allocation2 + $0x6a4] sm:$0xf]
    %v460 = vld [vmem:[#allocation2 + $0x6a8] sm:$0xf]
    %v461 = vld [vmem:[#allocation2 + $0x6ac] sm:$0xf]
    %v462 = vld [vmem:[#allocation2 + $0x6b0] sm:$0xf]
    %v463 = vld [vmem:[#allocation2 + $0x6b4] sm:$0xf]
    %v464 = vld [vmem:[#allocation2 + $0x6b8] sm:$0xf]
    %v465 = vld [vmem:[#allocation2 + $0x6bc] sm:$0xf]
    %v466 = vld [vmem:[#allocation2 + $0x6c0] sm:$0xf]
    %v467 = vld [vmem:[#allocation2 + $0x6c4] sm:$0xf]
    %v468 = vld [vmem:[#allocation2 + $0x6c8] sm:$0xf]
    %v469 = vld [vmem:[#allocation2 + $0x6cc] sm:$0xf]
    %v470 = vld [vmem:[#allocation2 + $0x6d0] sm:$0xf]
    %v471 = vld [vmem:[#allocation2 + $0x6d4] sm:$0xf]
    %v472 = vld [vmem:[#allocation2 + $0x6d8] sm:$0xf]
    %v473 = vld [vmem:[#allocation2 + $0x6dc] sm:$0xf]
    %v474 = vld [vmem:[#allocation2 + $0x6e0] sm:$0xf]
    %v475 = vld [vmem:[#allocation2 + $0x6e4] sm:$0xf]
    %v476 = vld [vmem:[#allocation2 + $0x6e8] sm:$0xf]
    %v477 = vld [vmem:[#allocation2 + $0x6ec] sm:$0xf]
    %v478 = vld [vmem:[#allocation2 + $0x6f0] sm:$0xf]
    %v479 = vld [vmem:[#allocation2 + $0x6f4] sm:$0xf]
    %v480 = vld [vmem:[#allocation2 + $0x6f8] sm:$0xf]
    %v481 = vld [vmem:[#allocation2 + $0x6fc] sm:$0xf]
    %v482 = vld [vmem:[#allocation2 + $0x700] sm:$0xf]
    %v483 = vld [vmem:[#allocation2 + $0x704] sm:$0xf]
    %v484 = vld [vmem:[#allocation2 + $0x708] sm:$0xf]
    %v485 = vld [vmem:[#allocation2 + $0x70c] sm:$0xf]
    %v486 = vld [vmem:[#allocation2 + $0x710] sm:$0xf]
    %v487 = vld [vmem:[#allocation2 + $0x714] sm:$0xf]
    %v488 = vld [vmem:[#allocation2 + $0x718] sm:$0xf]
    %v489 = vld [vmem:[#allocation2 + $0x71c] sm:$0xf]
    %v490 = vld [vmem:[#allocation2 + $0x720] sm:$0xf]
    %v491 = vld [vmem:[#allocation2 + $0x724] sm:$0xf]
    %v492 = vld [vmem:[#allocation2 + $0x728] sm:$0xf]
    %v493 = vld [vmem:[#allocation2 + $0x72c] sm:$0xf]
    %v494 = vld [vmem:[#allocation2 + $0x730] sm:$0xf]
    %v495 = vld [vmem:[#allocation2 + $0x734] sm:$0xf]
    %v496 = vld [vmem:[#allocation2 + $0x738] sm:$0xf]
    %v497 = vld [vmem:[#allocation2 + $0x73c] sm:$0xf]
    %v498 = vld [vmem:[#allocation2 + $0x740] sm:$0xf]
    %v499 = vld [vmem:[#allocation2 + $0x744] sm:$0xf]
    %v500 = vld [vmem:[#allocation2 + $0x748] sm:$0xf]
    %v501 = vld [vmem:[#allocation2 + $0x74c] sm:$0xf]
    %v502 = vld [vmem:[#allocation2 + $0x750] sm:$0xf]
    %v503 = vld [vmem:[#allocation2 + $0x754] sm:$0xf]
    %v504 = vld [vmem:[#allocation2 + $0x758] sm:$0xf]
    %v505 = vld [vmem:[#allocation2 + $0x75c] sm:$0xf]
    %v506 = vld [vmem:[#allocation2 + $0x760] sm:$0xf]
    %v507 = vld [vmem:[#allocation2 + $0x764] sm:$0xf]
    %v508 = vld [vmem:[#allocation2 + $0x768] sm:$0xf]
    %v509 = vld [vmem:[#allocation2 + $0x76c] sm:$0xf]
    %v510 = vld [vmem:[#allocation2 + $0x770] sm:$0xf]
    %v511 = vld [vmem:[#allocation2 + $0x774] sm:$0xf]
    %v512 = vld [vmem:[#allocation2 + $0x778] sm:$0xf]
    %v513 = vld [vmem:[#allocation2 + $0x77c] sm:$0xf]
    %v514 = vld [vmem:[#allocation2 + $0x780] sm:$0xf]
    %v515 = vld [vmem:[#allocation2 + $0x784] sm:$0xf]
    %v516 = vld [vmem:[#allocation2 + $0x788] sm:$0xf]
    %v517 = vld [vmem:[#allocation2 + $0x78c] sm:$0xf]
    %v518 = vld [vmem:[#allocation2 + $0x790] sm:$0xf]
    %v519 = vld [vmem:[#allocation2 + $0x794] sm:$0xf]
    %v520 = vld [vmem:[#allocation2 + $0x798] sm:$0xf]
    %v521 = vld [vmem:[#allocation2 + $0x79c] sm:$0xf]
    %v522 = vld [vmem:[#allocation2 + $0x7a0] sm:$0xf]
    %v523 = vld [vmem:[#allocation2 + $0x7a4] sm:$0xf]
    %v524 = vld [vmem:[#allocation2 + $0x7a8] sm:$0xf]
    %v525 = vld [vmem:[#allocation2 + $0x7ac] sm:$0xf]
    %v526 = vld [vmem:[#allocation2 + $0x7b0] sm:$0xf]
    %v527 = vld [vmem:[#allocation2 + $0x7b4] sm:$0xf]
    %v528 = vld [vmem:[#allocation2 + $0x7b8] sm:$0xf]
    %v529 = vld [vmem:[#allocation2 + $0x7bc] sm:$0xf]
    %v530 = vld [vmem:[#allocation2 + $0x7c0] sm:$0xf]
    %v531 = vld [vmem:[#allocation2 + $0x7c4] sm:$0xf]
    %v532 = vld [vmem:[#allocation2 + $0x7c8] sm:$0xf]
    %v533 = vld [vmem:[#allocation2 + $0x7cc] sm:$0xf]
    %v534 = vld [vmem:[#allocation2 + $0x7d0] sm:$0xf]
    %v535 = vld [vmem:[#allocation2 + $0x7d4] sm:$0xf]
    %v536 = vld [vmem:[#allocation2 + $0x7d8] sm:$0xf]
    %v537 = vld [vmem:[#allocation2 + $0x7dc] sm:$0xf]
    %v538 = vld [vmem:[#allocation2 + $0x7e0] sm:$0xf]
    %v539 = vld [vmem:[#allocation2 + $0x7e4] sm:$0xf]
    %v540 = vld [vmem:[#allocation2 + $0x7e8] sm:$0xf]
    %v541 = vld [vmem:[#allocation2 + $0x7ec] sm:$0xf]
    %v542 = vld [vmem:[#allocation2 + $0x7f0] sm:$0xf]
    %v543 = vld [vmem:[#allocation2 + $0x7f4] sm:$0xf]
    %v544 = vld [vmem:[#allocation2 + $0x7f8] sm:$0xf]
    %v545 = vld [vmem:[#allocation2 + $0x7fc] sm:$0xf]
    %v546 = vld [vmem:[%s2] sm:$0x1]
    %v548 = vlaneseq
    %v549 = vshrl.u32 %v548, 7
    %v550 = vsub.s32 0, %v549
    %v551 = vrot.slane %v546, %v550
    %v557 = vcombine.high %v30, %v30
    %v559 = vunpack.c.l.s4 1966171168
    %v560 = vunpack.c.0.s8 %v559
    %v561 = vlaneseq
    %v562 = vshrl.u32 %v561, 7
    %v563 = vsub.s32 %v560, %v562
    %v564 = vrot.slane %v30, %v563
    %v566 = vunpack.c.l.s4 1966171168
    %v567 = vunpack.c.0.s8 %v566
    %v568 = vlaneseq
    %v569 = vshrl.u32 %v568, 7
    %v570 = vsub.s32 %v567, %v569
    %v571 = vrot.slane %v557, %v570
    %v572 = vcombine.high %v564, %v564
    %v573 = vcombine.high %v571, %v571
    %v575 = vunpack.c.l.s4 1966171168
    %v576 = vunpack.c.0.s8 %v575
    %v577 = vlaneseq
    %v578 = vshrl.u32 %v577, 7
    %v579 = vsub.s32 %v576, %v578
    %v580 = vrot.slane %v564, %v579
    %v582 = vunpack.c.l.s4 1966171168
    %v583 = vunpack.c.0.s8 %v582
    %v584 = vlaneseq
    %v585 = vshrl.u32 %v584, 7
    %v586 = vsub.s32 %v583, %v585
    %v587 = vrot.slane %v571, %v586
    %v589 = vunpack.c.l.s4 1966171168
    %v590 = vunpack.c.0.s8 %v589
    %v591 = vlaneseq
    %v592 = vshrl.u32 %v591, 7
    %v593 = vsub.s32 %v590, %v592
    %v594 = vrot.slane %v572, %v593
    %v596 = vunpack.c.l.s4 1966171168
    %v597 = vunpack.c.0.s8 %v596
    %v598 = vlaneseq
    %v599 = vshrl.u32 %v598, 7
    %v600 = vsub.s32 %v597, %v599
    %v601 = vrot.slane %v573, %v600
    %v602 = vcombine.high %v580, %v580
    %v603 = vcombine.high %v587, %v587
    %v604 = vcombine.high %v594, %v594
    %v605 = vcombine.high %v601, %v601
    %v606 = vcombine.high %v31, %v31
    %v608 = vunpack.c.l.s4 1966171168
    %v609 = vunpack.c.0.s8 %v608
    %v610 = vlaneseq
    %v611 = vshrl.u32 %v610, 7
    %v612 = vsub.s32 %v609, %v611
    %v613 = vrot.slane %v31, %v612
    %v615 = vunpack.c.l.s4 1966171168
    %v616 = vunpack.c.0.s8 %v615
    %v617 = vlaneseq
    %v618 = vshrl.u32 %v617, 7
    %v619 = vsub.s32 %v616, %v618
    %v620 = vrot.slane %v606, %v619
    %v621 = vcombine.high %v613, %v613
    %v622 = vcombine.high %v620, %v620
    %v624 = vunpack.c.l.s4 1966171168
    %v625 = vunpack.c.0.s8 %v624
    %v626 = vlaneseq
    %v627 = vshrl.u32 %v626, 7
    %v628 = vsub.s32 %v625, %v627
    %v629 = vrot.slane %v613, %v628
    %v631 = vunpack.c.l.s4 1966171168
    %v632 = vunpack.c.0.s8 %v631
    %v633 = vlaneseq
    %v634 = vshrl.u32 %v633, 7
    %v635 = vsub.s32 %v632, %v634
    %v636 = vrot.slane %v620, %v635
    %v638 = vunpack.c.l.s4 1966171168
    %v639 = vunpack.c.0.s8 %v638
    %v640 = vlaneseq
    %v641 = vshrl.u32 %v640, 7
    %v642 = vsub.s32 %v639, %v641
    %v643 = vrot.slane %v621, %v642
    %v645 = vunpack.c.l.s4 1966171168
    %v646 = vunpack.c.0.s8 %v645
    %v647 = vlaneseq
    %v648 = vshrl.u32 %v647, 7
    %v649 = vsub.s32 %v646, %v648
    %v650 = vrot.slane %v622, %v649
    %v651 = vcombine.high %v629, %v629
    %v652 = vcombine.high %v636, %v636
    %v653 = vcombine.high %v643, %v643
    %v654 = vcombine.high %v650, %v650
    %v655 = vcombine.high %v32, %v32
    %v657 = vunpack.c.l.s4 1966171168
    %v658 = vunpack.c.0.s8 %v657
    %v659 = vlaneseq
    %v660 = vshrl.u32 %v659, 7
    %v661 = vsub.s32 %v658, %v660
    %v662 = vrot.slane %v32, %v661
    %v664 = vunpack.c.l.s4 1966171168
    %v665 = vunpack.c.0.s8 %v664
    %v666 = vlaneseq
    %v667 = vshrl.u32 %v666, 7
    %v668 = vsub.s32 %v665, %v667
    %v669 = vrot.slane %v655, %v668
    %v670 = vcombine.high %v662, %v662
    %v671 = vcombine.high %v669, %v669
    %v673 = vunpack.c.l.s4 1966171168
    %v674 = vunpack.c.0.s8 %v673
    %v675 = vlaneseq
    %v676 = vshrl.u32 %v675, 7
    %v677 = vsub.s32 %v674, %v676
    %v678 = vrot.slane %v662, %v677
    %v680 = vunpack.c.l.s4 1966171168
    %v681 = vunpack.c.0.s8 %v680
    %v682 = vlaneseq
    %v683 = vshrl.u32 %v682, 7
    %v684 = vsub.s32 %v681, %v683
    %v685 = vrot.slane %v669, %v684
    %v687 = vunpack.c.l.s4 1966171168
    %v688 = vunpack.c.0.s8 %v687
    %v689 = vlaneseq
    %v690 = vshrl.u32 %v689, 7
    %v691 = vsub.s32 %v688, %v690
    %v692 = vrot.slane %v670, %v691
    %v694 = vunpack.c.l.s4 1966171168
    %v695 = vunpack.c.0.s8 %v694
    %v696 = vlaneseq
    %v697 = vshrl.u32 %v696, 7
    %v698 = vsub.s32 %v695, %v697
    %v699 = vrot.slane %v671, %v698
    %v700 = vcombine.high %v678, %v678
    %v701 = vcombine.high %v685, %v685
    %v702 = vcombine.high %v692, %v692
    %v703 = vcombine.high %v699, %v699
    %v704 = vcombine.high %v33, %v33
    %v706 = vunpack.c.l.s4 1966171168
    %v707 = vunpack.c.0.s8 %v706
    %v708 = vlaneseq
    %v709 = vshrl.u32 %v708, 7
    %v710 = vsub.s32 %v707, %v709
    %v711 = vrot.slane %v33, %v710
    %v713 = vunpack.c.l.s4 1966171168
    %v714 = vunpack.c.0.s8 %v713
    %v715 = vlaneseq
    %v716 = vshrl.u32 %v715, 7
    %v717 = vsub.s32 %v714, %v716
    %v718 = vrot.slane %v704, %v717
    %v719 = vcombine.high %v711, %v711
    %v720 = vcombine.high %v718, %v718
    %v722 = vunpack.c.l.s4 1966171168
    %v723 = vunpack.c.0.s8 %v722
    %v724 = vlaneseq
    %v725 = vshrl.u32 %v724, 7
    %v726 = vsub.s32 %v723, %v725
    %v727 = vrot.slane %v711, %v726
    %v729 = vunpack.c.l.s4 1966171168
    %v730 = vunpack.c.0.s8 %v729
    %v731 = vlaneseq
    %v732 = vshrl.u32 %v731, 7
    %v733 = vsub.s32 %v730, %v732
    %v734 = vrot.slane %v718, %v733
    %v736 = vunpack.c.l.s4 1966171168
    %v737 = vunpack.c.0.s8 %v736
    %v738 = vlaneseq
    %v739 = vshrl.u32 %v738, 7
    %v740 = vsub.s32 %v737, %v739
    %v741 = vrot.slane %v719, %v740
    %v743 = vunpack.c.l.s4 1966171168
    %v744 = vunpack.c.0.s8 %v743
    %v745 = vlaneseq
    %v746 = vshrl.u32 %v745, 7
    %v747 = vsub.s32 %v744, %v746
    %v748 = vrot.slane %v720, %v747
    %v749 = vcombine.high %v727, %v727
    %v750 = vcombine.high %v734, %v734
    %v751 = vcombine.high %v741, %v741
    %v752 = vcombine.high %v748, %v748
    %v1297 = vunpack.c.l.b16 %v34
    %v1298 = vunpack.c.l.b16 %v35
    %v1299 = vunpack.c.l.b16 %v36
    %v1300 = vunpack.c.l.b16 %v37
    %v1301 = vunpack.c.l.b16 %v38
    %v1302 = vunpack.c.l.b16 %v39
    %v1303 = vunpack.c.l.b16 %v40
    %v1304 = vunpack.c.l.b16 %v41
    %v1305 = vunpack.c.l.b16 %v42
    %v1306 = vunpack.c.l.b16 %v43
    %v1307 = vunpack.c.l.b16 %v44
    %v1308 = vunpack.c.l.b16 %v45
    %v1309 = vunpack.c.l.b16 %v46
    %v1310 = vunpack.c.l.b16 %v47
    %v1311 = vunpack.c.l.b16 %v48
    %v1312 = vunpack.c.l.b16 %v49
    %v1313 = vunpack.c.l.b16 %v50
    %v1314 = vunpack.c.l.b16 %v51
    %v1315 = vunpack.c.l.b16 %v52
    %v1316 = vunpack.c.l.b16 %v53
    %v1317 = vunpack.c.l.b16 %v54
    %v1318 = vunpack.c.l.b16 %v55
    %v1319 = vunpack.c.l.b16 %v56
    %v1320 = vunpack.c.l.b16 %v57
    %v1321 = vunpack.c.l.b16 %v58
    %v1322 = vunpack.c.l.b16 %v59
    %v1323 = vunpack.c.l.b16 %v60
    %v1324 = vunpack.c.l.b16 %v61
    %v1325 = vunpack.c.l.b16 %v62
    %v1326 = vunpack.c.l.b16 %v63
    %v1327 = vunpack.c.l.b16 %v64
    %v1328 = vunpack.c.l.b16 %v65
    %v1329 = vunpack.c.l.b16 %v66
    %v1330 = vunpack.c.l.b16 %v67
    %v1331 = vunpack.c.l.b16 %v68
    %v1332 = vunpack.c.l.b16 %v69
    %v1333 = vunpack.c.l.b16 %v70
    %v1334 = vunpack.c.l.b16 %v71
    %v1335 = vunpack.c.l.b16 %v72
    %v1336 = vunpack.c.l.b16 %v73
    %v1337 = vunpack.c.l.b16 %v74
    %v1338 = vunpack.c.l.b16 %v75
    %v1339 = vunpack.c.l.b16 %v76
    %v1340 = vunpack.c.l.b16 %v77
    %v1341 = vunpack.c.l.b16 %v78
    %v1342 = vunpack.c.l.b16 %v79
    %v1343 = vunpack.c.l.b16 %v80
    %v1344 = vunpack.c.l.b16 %v81
    %v1345 = vunpack.c.l.b16 %v82
    %v1346 = vunpack.c.l.b16 %v83
    %v1347 = vunpack.c.l.b16 %v84
    %v1348 = vunpack.c.l.b16 %v85
    %v1349 = vunpack.c.l.b16 %v86
    %v1350 = vunpack.c.l.b16 %v87
    %v1351 = vunpack.c.l.b16 %v88
    %v1352 = vunpack.c.l.b16 %v89
    %v1353 = vunpack.c.l.b16 %v90
    %v1354 = vunpack.c.l.b16 %v91
    %v1355 = vunpack.c.l.b16 %v92
    %v1356 = vunpack.c.l.b16 %v93
    %v1357 = vunpack.c.l.b16 %v94
    %v1358 = vunpack.c.l.b16 %v95
    %v1359 = vunpack.c.l.b16 %v96
    %v1360 = vunpack.c.l.b16 %v97
    %v1361 = vunpack.c.l.b16 %v98
    %v1362 = vunpack.c.l.b16 %v99
    %v1363 = vunpack.c.l.b16 %v100
    %v1364 = vunpack.c.l.b16 %v101
    %v1365 = vunpack.c.l.b16 %v102
    %v1366 = vunpack.c.l.b16 %v103
    %v1367 = vunpack.c.l.b16 %v104
    %v1368 = vunpack.c.l.b16 %v105
    %v1369 = vunpack.c.l.b16 %v106
    %v1370 = vunpack.c.l.b16 %v107
    %v1371 = vunpack.c.l.b16 %v108
    %v1372 = vunpack.c.l.b16 %v109
    %v1373 = vunpack.c.l.b16 %v110
    %v1374 = vunpack.c.l.b16 %v111
    %v1375 = vunpack.c.l.b16 %v112
    %v1376 = vunpack.c.l.b16 %v113
    %v1377 = vunpack.c.l.b16 %v114
    %v1378 = vunpack.c.l.b16 %v115
    %v1379 = vunpack.c.l.b16 %v116
    %v1380 = vunpack.c.l.b16 %v117
    %v1381 = vunpack.c.l.b16 %v118
    %v1382 = vunpack.c.l.b16 %v119
    %v1383 = vunpack.c.l.b16 %v120
    %v1384 = vunpack.c.l.b16 %v121
    %v1385 = vunpack.c.l.b16 %v122
    %v1386 = vunpack.c.l.b16 %v123
    %v1387 = vunpack.c.l.b16 %v124
    %v1388 = vunpack.c.l.b16 %v125
    %v1389 = vunpack.c.l.b16 %v126
    %v1390 = vunpack.c.l.b16 %v127
    %v1391 = vunpack.c.l.b16 %v128
    %v1392 = vunpack.c.l.b16 %v129
    %v1393 = vunpack.c.l.b16 %v130
    %v1394 = vunpack.c.l.b16 %v131
    %v1395 = vunpack.c.l.b16 %v132
    %v1396 = vunpack.c.l.b16 %v133
    %v1397 = vunpack.c.l.b16 %v134
    %v1398 = vunpack.c.l.b16 %v135
    %v1399 = vunpack.c.l.b16 %v136
    %v1400 = vunpack.c.l.b16 %v137
    %v1401 = vunpack.c.l.b16 %v138
    %v1402 = vunpack.c.l.b16 %v139
    %v1403 = vunpack.c.l.b16 %v140
    %v1404 = vunpack.c.l.b16 %v141
    %v1405 = vunpack.c.l.b16 %v142
    %v1406 = vunpack.c.l.b16 %v143
    %v1407 = vunpack.c.l.b16 %v144
    %v1408 = vunpack.c.l.b16 %v145
    %v1409 = vunpack.c.l.b16 %v146
    %v1410 = vunpack.c.l.b16 %v147
    %v1411 = vunpack.c.l.b16 %v148
    %v1412 = vunpack.c.l.b16 %v149
    %v1413 = vunpack.c.l.b16 %v150
    %v1414 = vunpack.c.l.b16 %v151
    %v1415 = vunpack.c.l.b16 %v152
    %v1416 = vunpack.c.l.b16 %v153
    %v1417 = vunpack.c.l.b16 %v154
    %v1418 = vunpack.c.l.b16 %v155
    %v1419 = vunpack.c.l.b16 %v156
    %v1420 = vunpack.c.l.b16 %v157
    %v1421 = vunpack.c.l.b16 %v158
    %v1422 = vunpack.c.l.b16 %v159
    %v1423 = vunpack.c.l.b16 %v160
    %v1424 = vunpack.c.l.b16 %v161
    %v1425 = vunpack.c.l.b16 %v162
    %v1426 = vunpack.c.l.b16 %v163
    %v1427 = vunpack.c.l.b16 %v164
    %v1428 = vunpack.c.l.b16 %v165
    %v1429 = vunpack.c.l.b16 %v166
    %v1430 = vunpack.c.l.b16 %v167
    %v1431 = vunpack.c.l.b16 %v168
    %v1432 = vunpack.c.l.b16 %v169
    %v1433 = vunpack.c.l.b16 %v170
    %v1434 = vunpack.c.l.b16 %v171
    %v1435 = vunpack.c.l.b16 %v172
    %v1436 = vunpack.c.l.b16 %v173
    %v1437 = vunpack.c.l.b16 %v174
    %v1438 = vunpack.c.l.b16 %v175
    %v1439 = vunpack.c.l.b16 %v176
    %v1440 = vunpack.c.l.b16 %v177
    %v1441 = vunpack.c.l.b16 %v178
    %v1442 = vunpack.c.l.b16 %v179
    %v1443 = vunpack.c.l.b16 %v180
    %v1444 = vunpack.c.l.b16 %v181
    %v1445 = vunpack.c.l.b16 %v182
    %v1446 = vunpack.c.l.b16 %v183
    %v1447 = vunpack.c.l.b16 %v184
    %v1448 = vunpack.c.l.b16 %v185
    %v1449 = vunpack.c.l.b16 %v186
    %v1450 = vunpack.c.l.b16 %v187
    %v1451 = vunpack.c.l.b16 %v188
    %v1452 = vunpack.c.l.b16 %v189
    %v1453 = vunpack.c.l.b16 %v190
    %v1454 = vunpack.c.l.b16 %v191
    %v1455 = vunpack.c.l.b16 %v192
    %v1456 = vunpack.c.l.b16 %v193
    %v1457 = vunpack.c.l.b16 %v194
    %v1458 = vunpack.c.l.b16 %v195
    %v1459 = vunpack.c.l.b16 %v196
    %v1460 = vunpack.c.l.b16 %v197
    %v1461 = vunpack.c.l.b16 %v198
    %v1462 = vunpack.c.l.b16 %v199
    %v1463 = vunpack.c.l.b16 %v200
    %v1464 = vunpack.c.l.b16 %v201
    %v1465 = vunpack.c.l.b16 %v202
    %v1466 = vunpack.c.l.b16 %v203
    %v1467 = vunpack.c.l.b16 %v204
    %v1468 = vunpack.c.l.b16 %v205
    %v1469 = vunpack.c.l.b16 %v206
    %v1470 = vunpack.c.l.b16 %v207
    %v1471 = vunpack.c.l.b16 %v208
    %v1472 = vunpack.c.l.b16 %v209
    %v1473 = vunpack.c.l.b16 %v210
    %v1474 = vunpack.c.l.b16 %v211
    %v1475 = vunpack.c.l.b16 %v212
    %v1476 = vunpack.c.l.b16 %v213
    %v1477 = vunpack.c.l.b16 %v214
    %v1478 = vunpack.c.l.b16 %v215
    %v1479 = vunpack.c.l.b16 %v216
    %v1480 = vunpack.c.l.b16 %v217
    %v1481 = vunpack.c.l.b16 %v218
    %v1482 = vunpack.c.l.b16 %v219
    %v1483 = vunpack.c.l.b16 %v220
    %v1484 = vunpack.c.l.b16 %v221
    %v1485 = vunpack.c.l.b16 %v222
    %v1486 = vunpack.c.l.b16 %v223
    %v1487 = vunpack.c.l.b16 %v224
    %v1488 = vunpack.c.l.b16 %v225
    %v1489 = vunpack.c.l.b16 %v226
    %v1490 = vunpack.c.l.b16 %v227
    %v1491 = vunpack.c.l.b16 %v228
    %v1492 = vunpack.c.l.b16 %v229
    %v1493 = vunpack.c.l.b16 %v230
    %v1494 = vunpack.c.l.b16 %v231
    %v1495 = vunpack.c.l.b16 %v232
    %v1496 = vunpack.c.l.b16 %v233
    %v1497 = vunpack.c.l.b16 %v234
    %v1498 = vunpack.c.l.b16 %v235
    %v1499 = vunpack.c.l.b16 %v236
    %v1500 = vunpack.c.l.b16 %v237
    %v1501 = vunpack.c.l.b16 %v238
    %v1502 = vunpack.c.l.b16 %v239
    %v1503 = vunpack.c.l.b16 %v240
    %v1504 = vunpack.c.l.b16 %v241
    %v1505 = vunpack.c.l.b16 %v242
    %v1506 = vunpack.c.l.b16 %v243
    %v1507 = vunpack.c.l.b16 %v244
    %v1508 = vunpack.c.l.b16 %v245
    %v1509 = vunpack.c.l.b16 %v246
    %v1510 = vunpack.c.l.b16 %v247
    %v1511 = vunpack.c.l.b16 %v248
    %v1512 = vunpack.c.l.b16 %v249
    %v1513 = vunpack.c.l.b16 %v250
    %v1514 = vunpack.c.l.b16 %v251
    %v1515 = vunpack.c.l.b16 %v252
    %v1516 = vunpack.c.l.b16 %v253
    %v1517 = vunpack.c.l.b16 %v254
    %v1518 = vunpack.c.l.b16 %v255
    %v1519 = vunpack.c.l.b16 %v256
    %v1520 = vunpack.c.l.b16 %v257
    %v1521 = vunpack.c.l.b16 %v258
    %v1522 = vunpack.c.l.b16 %v259
    %v1523 = vunpack.c.l.b16 %v260
    %v1524 = vunpack.c.l.b16 %v261
    %v1525 = vunpack.c.l.b16 %v262
    %v1526 = vunpack.c.l.b16 %v263
    %v1527 = vunpack.c.l.b16 %v264
    %v1528 = vunpack.c.l.b16 %v265
    %v1529 = vunpack.c.l.b16 %v266
    %v1530 = vunpack.c.l.b16 %v267
    %v1531 = vunpack.c.l.b16 %v268
    %v1532 = vunpack.c.l.b16 %v269
    %v1533 = vunpack.c.l.b16 %v270
    %v1534 = vunpack.c.l.b16 %v271
    %v1535 = vunpack.c.l.b16 %v272
    %v1536 = vunpack.c.l.b16 %v273
    %v1537 = vunpack.c.l.b16 %v274
    %v1538 = vunpack.c.l.b16 %v275
    %v1539 = vunpack.c.l.b16 %v276
    %v1540 = vunpack.c.l.b16 %v277
    %v1541 = vunpack.c.l.b16 %v278
    %v1542 = vunpack.c.l.b16 %v279
    %v1543 = vunpack.c.l.b16 %v280
    %v1544 = vunpack.c.l.b16 %v281
    %v1545 = vunpack.c.l.b16 %v282
    %v1546 = vunpack.c.l.b16 %v283
    %v1547 = vunpack.c.l.b16 %v284
    %v1548 = vunpack.c.l.b16 %v285
    %v1549 = vunpack.c.l.b16 %v286
    %v1550 = vunpack.c.l.b16 %v287
    %v1551 = vunpack.c.l.b16 %v288
    %v1552 = vunpack.c.l.b16 %v289
    %v1553 = vunpack.c.l.b16 %v290
    %v1554 = vunpack.c.l.b16 %v291
    %v1555 = vunpack.c.l.b16 %v292
    %v1556 = vunpack.c.l.b16 %v293
    %v1557 = vunpack.c.l.b16 %v294
    %v1558 = vunpack.c.l.b16 %v295
    %v1559 = vunpack.c.l.b16 %v296
    %v1560 = vunpack.c.l.b16 %v297
    %v1561 = vunpack.c.l.b16 %v298
    %v1562 = vunpack.c.l.b16 %v299
    %v1563 = vunpack.c.l.b16 %v300
    %v1564 = vunpack.c.l.b16 %v301
    %v1565 = vunpack.c.l.b16 %v302
    %v1566 = vunpack.c.l.b16 %v303
    %v1567 = vunpack.c.l.b16 %v304
    %v1568 = vunpack.c.l.b16 %v305
    %v1569 = vunpack.c.l.b16 %v306
    %v1570 = vunpack.c.l.b16 %v307
    %v1571 = vunpack.c.l.b16 %v308
    %v1572 = vunpack.c.l.b16 %v309
    %v1573 = vunpack.c.l.b16 %v310
    %v1574 = vunpack.c.l.b16 %v311
    %v1575 = vunpack.c.l.b16 %v312
    %v1576 = vunpack.c.l.b16 %v313
    %v1577 = vunpack.c.l.b16 %v314
    %v1578 = vunpack.c.l.b16 %v315
    %v1579 = vunpack.c.l.b16 %v316
    %v1580 = vunpack.c.l.b16 %v317
    %v1581 = vunpack.c.l.b16 %v318
    %v1582 = vunpack.c.l.b16 %v319
    %v1583 = vunpack.c.l.b16 %v320
    %v1584 = vunpack.c.l.b16 %v321
    %v1585 = vunpack.c.l.b16 %v322
    %v1586 = vunpack.c.l.b16 %v323
    %v1587 = vunpack.c.l.b16 %v324
    %v1588 = vunpack.c.l.b16 %v325
    %v1589 = vunpack.c.l.b16 %v326
    %v1590 = vunpack.c.l.b16 %v327
    %v1591 = vunpack.c.l.b16 %v328
    %v1592 = vunpack.c.l.b16 %v329
    %v1593 = vunpack.c.l.b16 %v330
    %v1594 = vunpack.c.l.b16 %v331
    %v1595 = vunpack.c.l.b16 %v332
    %v1596 = vunpack.c.l.b16 %v333
    %v1597 = vunpack.c.l.b16 %v334
    %v1598 = vunpack.c.l.b16 %v335
    %v1599 = vunpack.c.l.b16 %v336
    %v1600 = vunpack.c.l.b16 %v337
    %v1601 = vunpack.c.l.b16 %v338
    %v1602 = vunpack.c.l.b16 %v339
    %v1603 = vunpack.c.l.b16 %v340
    %v1604 = vunpack.c.l.b16 %v341
    %v1605 = vunpack.c.l.b16 %v342
    %v1606 = vunpack.c.l.b16 %v343
    %v1607 = vunpack.c.l.b16 %v344
    %v1608 = vunpack.c.l.b16 %v345
    %v1609 = vunpack.c.l.b16 %v346
    %v1610 = vunpack.c.l.b16 %v347
    %v1611 = vunpack.c.l.b16 %v348
    %v1612 = vunpack.c.l.b16 %v349
    %v1613 = vunpack.c.l.b16 %v350
    %v1614 = vunpack.c.l.b16 %v351
    %v1615 = vunpack.c.l.b16 %v352
    %v1616 = vunpack.c.l.b16 %v353
    %v1617 = vunpack.c.l.b16 %v354
    %v1618 = vunpack.c.l.b16 %v355
    %v1619 = vunpack.c.l.b16 %v356
    %v1620 = vunpack.c.l.b16 %v357
    %v1621 = vunpack.c.l.b16 %v358
    %v1622 = vunpack.c.l.b16 %v359
    %v1623 = vunpack.c.l.b16 %v360
    %v1624 = vunpack.c.l.b16 %v361
    %v1625 = vunpack.c.l.b16 %v362
    %v1626 = vunpack.c.l.b16 %v363
    %v1627 = vunpack.c.l.b16 %v364
    %v1628 = vunpack.c.l.b16 %v365
    %v1629 = vunpack.c.l.b16 %v366
    %v1630 = vunpack.c.l.b16 %v367
    %v1631 = vunpack.c.l.b16 %v368
    %v1632 = vunpack.c.l.b16 %v369
    %v1633 = vunpack.c.l.b16 %v370
    %v1634 = vunpack.c.l.b16 %v371
    %v1635 = vunpack.c.l.b16 %v372
    %v1636 = vunpack.c.l.b16 %v373
    %v1637 = vunpack.c.l.b16 %v374
    %v1638 = vunpack.c.l.b16 %v375
    %v1639 = vunpack.c.l.b16 %v376
    %v1640 = vunpack.c.l.b16 %v377
    %v1641 = vunpack.c.l.b16 %v378
    %v1642 = vunpack.c.l.b16 %v379
    %v1643 = vunpack.c.l.b16 %v380
    %v1644 = vunpack.c.l.b16 %v381
    %v1645 = vunpack.c.l.b16 %v382
    %v1646 = vunpack.c.l.b16 %v383
    %v1647 = vunpack.c.l.b16 %v384
    %v1648 = vunpack.c.l.b16 %v385
    %v1649 = vunpack.c.l.b16 %v386
    %v1650 = vunpack.c.l.b16 %v387
    %v1651 = vunpack.c.l.b16 %v388
    %v1652 = vunpack.c.l.b16 %v389
    %v1653 = vunpack.c.l.b16 %v390
    %v1654 = vunpack.c.l.b16 %v391
    %v1655 = vunpack.c.l.b16 %v392
    %v1656 = vunpack.c.l.b16 %v393
    %v1657 = vunpack.c.l.b16 %v394
    %v1658 = vunpack.c.l.b16 %v395
    %v1659 = vunpack.c.l.b16 %v396
    %v1660 = vunpack.c.l.b16 %v397
    %v1661 = vunpack.c.l.b16 %v398
    %v1662 = vunpack.c.l.b16 %v399
    %v1663 = vunpack.c.l.b16 %v400
    %v1664 = vunpack.c.l.b16 %v401
    %v1665 = vunpack.c.l.b16 %v402
    %v1666 = vunpack.c.l.b16 %v403
    %v1667 = vunpack.c.l.b16 %v404
    %v1668 = vunpack.c.l.b16 %v405
    %v1669 = vunpack.c.l.b16 %v406
    %v1670 = vunpack.c.l.b16 %v407
    %v1671 = vunpack.c.l.b16 %v408
    %v1672 = vunpack.c.l.b16 %v409
    %v1673 = vunpack.c.l.b16 %v410
    %v1674 = vunpack.c.l.b16 %v411
    %v1675 = vunpack.c.l.b16 %v412
    %v1676 = vunpack.c.l.b16 %v413
    %v1677 = vunpack.c.l.b16 %v414
    %v1678 = vunpack.c.l.b16 %v415
    %v1679 = vunpack.c.l.b16 %v416
    %v1680 = vunpack.c.l.b16 %v417
    %v1681 = vunpack.c.l.b16 %v418
    %v1682 = vunpack.c.l.b16 %v419
    %v1683 = vunpack.c.l.b16 %v420
    %v1684 = vunpack.c.l.b16 %v421
    %v1685 = vunpack.c.l.b16 %v422
    %v1686 = vunpack.c.l.b16 %v423
    %v1687 = vunpack.c.l.b16 %v424
    %v1688 = vunpack.c.l.b16 %v425
    %v1689 = vunpack.c.l.b16 %v426
    %v1690 = vunpack.c.l.b16 %v427
    %v1691 = vunpack.c.l.b16 %v428
    %v1692 = vunpack.c.l.b16 %v429
    %v1693 = vunpack.c.l.b16 %v430
    %v1694 = vunpack.c.l.b16 %v431
    %v1695 = vunpack.c.l.b16 %v432
    %v1696 = vunpack.c.l.b16 %v433
    %v1697 = vunpack.c.l.b16 %v434
    %v1698 = vunpack.c.l.b16 %v435
    %v1699 = vunpack.c.l.b16 %v436
    %v1700 = vunpack.c.l.b16 %v437
    %v1701 = vunpack.c.l.b16 %v438
    %v1702 = vunpack.c.l.b16 %v439
    %v1703 = vunpack.c.l.b16 %v440
    %v1704 = vunpack.c.l.b16 %v441
    %v1705 = vunpack.c.l.b16 %v442
    %v1706 = vunpack.c.l.b16 %v443
    %v1707 = vunpack.c.l.b16 %v444
    %v1708 = vunpack.c.l.b16 %v445
    %v1709 = vunpack.c.l.b16 %v446
    %v1710 = vunpack.c.l.b16 %v447
    %v1711 = vunpack.c.l.b16 %v448
    %v1712 = vunpack.c.l.b16 %v449
    %v1713 = vunpack.c.l.b16 %v450
    %v1714 = vunpack.c.l.b16 %v451
    %v1715 = vunpack.c.l.b16 %v452
    %v1716 = vunpack.c.l.b16 %v453
    %v1717 = vunpack.c.l.b16 %v454
    %v1718 = vunpack.c.l.b16 %v455
    %v1719 = vunpack.c.l.b16 %v456
    %v1720 = vunpack.c.l.b16 %v457
    %v1721 = vunpack.c.l.b16 %v458
    %v1722 = vunpack.c.l.b16 %v459
    %v1723 = vunpack.c.l.b16 %v460
    %v1724 = vunpack.c.l.b16 %v461
    %v1725 = vunpack.c.l.b16 %v462
    %v1726 = vunpack.c.l.b16 %v463
    %v1727 = vunpack.c.l.b16 %v464
    %v1728 = vunpack.c.l.b16 %v465
    %v1729 = vunpack.c.l.b16 %v466
    %v1730 = vunpack.c.l.b16 %v467
    %v1731 = vunpack.c.l.b16 %v468
    %v1732 = vunpack.c.l.b16 %v469
    %v1733 = vunpack.c.l.b16 %v470
    %v1734 = vunpack.c.l.b16 %v471
    %v1735 = vunpack.c.l.b16 %v472
    %v1736 = vunpack.c.l.b16 %v473
    %v1737 = vunpack.c.l.b16 %v474
    %v1738 = vunpack.c.l.b16 %v475
    %v1739 = vunpack.c.l.b16 %v476
    %v1740 = vunpack.c.l.b16 %v477
    %v1741 = vunpack.c.l.b16 %v478
    %v1742 = vunpack.c.l.b16 %v479
    %v1743 = vunpack.c.l.b16 %v480
    %v1744 = vunpack.c.l.b16 %v481
    %v1745 = vunpack.c.l.b16 %v482
    %v1746 = vunpack.c.l.b16 %v483
    %v1747 = vunpack.c.l.b16 %v484
    %v1748 = vunpack.c.l.b16 %v485
    %v1749 = vunpack.c.l.b16 %v486
    %v1750 = vunpack.c.l.b16 %v487
    %v1751 = vunpack.c.l.b16 %v488
    %v1752 = vunpack.c.l.b16 %v489
    %v1753 = vunpack.c.l.b16 %v490
    %v1754 = vunpack.c.l.b16 %v491
    %v1755 = vunpack.c.l.b16 %v492
    %v1756 = vunpack.c.l.b16 %v493
    %v1757 = vunpack.c.l.b16 %v494
    %v1758 = vunpack.c.l.b16 %v495
    %v1759 = vunpack.c.l.b16 %v496
    %v1760 = vunpack.c.l.b16 %v497
    %v1761 = vunpack.c.l.b16 %v498
    %v1762 = vunpack.c.l.b16 %v499
    %v1763 = vunpack.c.l.b16 %v500
    %v1764 = vunpack.c.l.b16 %v501
    %v1765 = vunpack.c.l.b16 %v502
    %v1766 = vunpack.c.l.b16 %v503
    %v1767 = vunpack.c.l.b16 %v504
    %v1768 = vunpack.c.l.b16 %v505
    %v1769 = vunpack.c.l.b16 %v506
    %v1770 = vunpack.c.l.b16 %v507
    %v1771 = vunpack.c.l.b16 %v508
    %v1772 = vunpack.c.l.b16 %v509
    %v1773 = vunpack.c.l.b16 %v510
    %v1774 = vunpack.c.l.b16 %v511
    %v1775 = vunpack.c.l.b16 %v512
    %v1776 = vunpack.c.l.b16 %v513
    %v1777 = vunpack.c.l.b16 %v514
    %v1778 = vunpack.c.l.b16 %v515
    %v1779 = vunpack.c.l.b16 %v516
    %v1780 = vunpack.c.l.b16 %v517
    %v1781 = vunpack.c.l.b16 %v518
    %v1782 = vunpack.c.l.b16 %v519
    %v1783 = vunpack.c.l.b16 %v520
    %v1784 = vunpack.c.l.b16 %v521
    %v1785 = vunpack.c.l.b16 %v522
    %v1786 = vunpack.c.l.b16 %v523
    %v1787 = vunpack.c.l.b16 %v524
    %v1788 = vunpack.c.l.b16 %v525
    %v1789 = vunpack.c.l.b16 %v526
    %v1790 = vunpack.c.l.b16 %v527
    %v1791 = vunpack.c.l.b16 %v528
    %v1792 = vunpack.c.l.b16 %v529
    %v1793 = vunpack.c.l.b16 %v530
    %v1794 = vunpack.c.l.b16 %v531
    %v1795 = vunpack.c.l.b16 %v532
    %v1796 = vunpack.c.l.b16 %v533
    %v1797 = vunpack.c.l.b16 %v534
    %v1798 = vunpack.c.l.b16 %v535
    %v1799 = vunpack.c.l.b16 %v536
    %v1800 = vunpack.c.l.b16 %v537
    %v1801 = vunpack.c.l.b16 %v538
    %v1802 = vunpack.c.l.b16 %v539
    %v1803 = vunpack.c.l.b16 %v540
    %v1804 = vunpack.c.l.b16 %v541
    %v1805 = vunpack.c.l.b16 %v542
    %v1806 = vunpack.c.l.b16 %v543
    %v1807 = vunpack.c.l.b16 %v544
    %v1808 = vunpack.c.l.b16 %v545
    %v1809 = vpack.c.b16 %v1298, %v1297
    %v1810 = vpack.c.b16 %v1300, %v1299
    %v1811 = vpack.c.b16 %v1302, %v1301
    %v1812 = vpack.c.b16 %v1304, %v1303
    %v1813 = vpack.c.b16 %v1306, %v1305
    %v1814 = vpack.c.b16 %v1308, %v1307
    %v1815 = vpack.c.b16 %v1310, %v1309
    %v1816 = vpack.c.b16 %v1312, %v1311
    %v1817 = vpack.c.b16 %v1314, %v1313
    %v1818 = vpack.c.b16 %v1316, %v1315
    %v1819 = vpack.c.b16 %v1318, %v1317
    %v1820 = vpack.c.b16 %v1320, %v1319
    %v1821 = vpack.c.b16 %v1322, %v1321
    %v1822 = vpack.c.b16 %v1324, %v1323
    %v1823 = vpack.c.b16 %v1326, %v1325
    %v1824 = vpack.c.b16 %v1328, %v1327
    %v1825 = vpack.c.b16 %v1330, %v1329
    %v1826 = vpack.c.b16 %v1332, %v1331
    %v1827 = vpack.c.b16 %v1334, %v1333
    %v1828 = vpack.c.b16 %v1336, %v1335
    %v1829 = vpack.c.b16 %v1338, %v1337
    %v1830 = vpack.c.b16 %v1340, %v1339
    %v1831 = vpack.c.b16 %v1342, %v1341
    %v1832 = vpack.c.b16 %v1344, %v1343
    %v1833 = vpack.c.b16 %v1346, %v1345
    %v1834 = vpack.c.b16 %v1348, %v1347
    %v1835 = vpack.c.b16 %v1350, %v1349
    %v1836 = vpack.c.b16 %v1352, %v1351
    %v1837 = vpack.c.b16 %v1354, %v1353
    %v1838 = vpack.c.b16 %v1356, %v1355
    %v1839 = vpack.c.b16 %v1358, %v1357
    %v1840 = vpack.c.b16 %v1360, %v1359
    %v1841 = vpack.c.b16 %v1362, %v1361
    %v1842 = vpack.c.b16 %v1364, %v1363
    %v1843 = vpack.c.b16 %v1366, %v1365
    %v1844 = vpack.c.b16 %v1368, %v1367
    %v1845 = vpack.c.b16 %v1370, %v1369
    %v1846 = vpack.c.b16 %v1372, %v1371
    %v1847 = vpack.c.b16 %v1374, %v1373
    %v1848 = vpack.c.b16 %v1376, %v1375
    %v1849 = vpack.c.b16 %v1378, %v1377
    %v1850 = vpack.c.b16 %v1380, %v1379
    %v1851 = vpack.c.b16 %v1382, %v1381
    %v1852 = vpack.c.b16 %v1384, %v1383
    %v1853 = vpack.c.b16 %v1386, %v1385
    %v1854 = vpack.c.b16 %v1388, %v1387
    %v1855 = vpack.c.b16 %v1390, %v1389
    %v1856 = vpack.c.b16 %v1392, %v1391
    %v1857 = vpack.c.b16 %v1394, %v1393
    %v1858 = vpack.c.b16 %v1396, %v1395
    %v1859 = vpack.c.b16 %v1398, %v1397
    %v1860 = vpack.c.b16 %v1400, %v1399
    %v1861 = vpack.c.b16 %v1402, %v1401
    %v1862 = vpack.c.b16 %v1404, %v1403
    %v1863 = vpack.c.b16 %v1406, %v1405
    %v1864 = vpack.c.b16 %v1408, %v1407
    %v1865 = vpack.c.b16 %v1410, %v1409
    %v1866 = vpack.c.b16 %v1412, %v1411
    %v1867 = vpack.c.b16 %v1414, %v1413
    %v1868 = vpack.c.b16 %v1416, %v1415
    %v1869 = vpack.c.b16 %v1418, %v1417
    %v1870 = vpack.c.b16 %v1420, %v1419
    %v1871 = vpack.c.b16 %v1422, %v1421
    %v1872 = vpack.c.b16 %v1424, %v1423
    %v1873 = vpack.c.b16 %v1426, %v1425
    %v1874 = vpack.c.b16 %v1428, %v1427
    %v1875 = vpack.c.b16 %v1430, %v1429
    %v1876 = vpack.c.b16 %v1432, %v1431
    %v1877 = vpack.c.b16 %v1434, %v1433
    %v1878 = vpack.c.b16 %v1436, %v1435
    %v1879 = vpack.c.b16 %v1438, %v1437
    %v1880 = vpack.c.b16 %v1440, %v1439
    %v1881 = vpack.c.b16 %v1442, %v1441
    %v1882 = vpack.c.b16 %v1444, %v1443
    %v1883 = vpack.c.b16 %v1446, %v1445
    %v1884 = vpack.c.b16 %v1448, %v1447
    %v1885 = vpack.c.b16 %v1450, %v1449
    %v1886 = vpack.c.b16 %v1452, %v1451
    %v1887 = vpack.c.b16 %v1454, %v1453
    %v1888 = vpack.c.b16 %v1456, %v1455
    %v1889 = vpack.c.b16 %v1458, %v1457
    %v1890 = vpack.c.b16 %v1460, %v1459
    %v1891 = vpack.c.b16 %v1462, %v1461
    %v1892 = vpack.c.b16 %v1464, %v1463
    %v1893 = vpack.c.b16 %v1466, %v1465
    %v1894 = vpack.c.b16 %v1468, %v1467
    %v1895 = vpack.c.b16 %v1470, %v1469
    %v1896 = vpack.c.b16 %v1472, %v1471
    %v1897 = vpack.c.b16 %v1474, %v1473
    %v1898 = vpack.c.b16 %v1476, %v1475
    %v1899 = vpack.c.b16 %v1478, %v1477
    %v1900 = vpack.c.b16 %v1480, %v1479
    %v1901 = vpack.c.b16 %v1482, %v1481
    %v1902 = vpack.c.b16 %v1484, %v1483
    %v1903 = vpack.c.b16 %v1486, %v1485
    %v1904 = vpack.c.b16 %v1488, %v1487
    %v1905 = vpack.c.b16 %v1490, %v1489
    %v1906 = vpack.c.b16 %v1492, %v1491
    %v1907 = vpack.c.b16 %v1494, %v1493
    %v1908 = vpack.c.b16 %v1496, %v1495
    %v1909 = vpack.c.b16 %v1498, %v1497
    %v1910 = vpack.c.b16 %v1500, %v1499
    %v1911 = vpack.c.b16 %v1502, %v1501
    %v1912 = vpack.c.b16 %v1504, %v1503
    %v1913 = vpack.c.b16 %v1506, %v1505
    %v1914 = vpack.c.b16 %v1508, %v1507
    %v1915 = vpack.c.b16 %v1510, %v1509
    %v1916 = vpack.c.b16 %v1512, %v1511
    %v1917 = vpack.c.b16 %v1514, %v1513
    %v1918 = vpack.c.b16 %v1516, %v1515
    %v1919 = vpack.c.b16 %v1518, %v1517
    %v1920 = vpack.c.b16 %v1520, %v1519
    %v1921 = vpack.c.b16 %v1522, %v1521
    %v1922 = vpack.c.b16 %v1524, %v1523
    %v1923 = vpack.c.b16 %v1526, %v1525
    %v1924 = vpack.c.b16 %v1528, %v1527
    %v1925 = vpack.c.b16 %v1530, %v1529
    %v1926 = vpack.c.b16 %v1532, %v1531
    %v1927 = vpack.c.b16 %v1534, %v1533
    %v1928 = vpack.c.b16 %v1536, %v1535
    %v1929 = vpack.c.b16 %v1538, %v1537
    %v1930 = vpack.c.b16 %v1540, %v1539
    %v1931 = vpack.c.b16 %v1542, %v1541
    %v1932 = vpack.c.b16 %v1544, %v1543
    %v1933 = vpack.c.b16 %v1546, %v1545
    %v1934 = vpack.c.b16 %v1548, %v1547
    %v1935 = vpack.c.b16 %v1550, %v1549
    %v1936 = vpack.c.b16 %v1552, %v1551
    %v1937 = vpack.c.b16 %v1554, %v1553
    %v1938 = vpack.c.b16 %v1556, %v1555
    %v1939 = vpack.c.b16 %v1558, %v1557
    %v1940 = vpack.c.b16 %v1560, %v1559
    %v1941 = vpack.c.b16 %v1562, %v1561
    %v1942 = vpack.c.b16 %v1564, %v1563
    %v1943 = vpack.c.b16 %v1566, %v1565
    %v1944 = vpack.c.b16 %v1568, %v1567
    %v1945 = vpack.c.b16 %v1570, %v1569
    %v1946 = vpack.c.b16 %v1572, %v1571
    %v1947 = vpack.c.b16 %v1574, %v1573
    %v1948 = vpack.c.b16 %v1576, %v1575
    %v1949 = vpack.c.b16 %v1578, %v1577
    %v1950 = vpack.c.b16 %v1580, %v1579
    %v1951 = vpack.c.b16 %v1582, %v1581
    %v1952 = vpack.c.b16 %v1584, %v1583
    %v1953 = vpack.c.b16 %v1586, %v1585
    %v1954 = vpack.c.b16 %v1588, %v1587
    %v1955 = vpack.c.b16 %v1590, %v1589
    %v1956 = vpack.c.b16 %v1592, %v1591
    %v1957 = vpack.c.b16 %v1594, %v1593
    %v1958 = vpack.c.b16 %v1596, %v1595
    %v1959 = vpack.c.b16 %v1598, %v1597
    %v1960 = vpack.c.b16 %v1600, %v1599
    %v1961 = vpack.c.b16 %v1602, %v1601
    %v1962 = vpack.c.b16 %v1604, %v1603
    %v1963 = vpack.c.b16 %v1606, %v1605
    %v1964 = vpack.c.b16 %v1608, %v1607
    %v1965 = vpack.c.b16 %v1610, %v1609
    %v1966 = vpack.c.b16 %v1612, %v1611
    %v1967 = vpack.c.b16 %v1614, %v1613
    %v1968 = vpack.c.b16 %v1616, %v1615
    %v1969 = vpack.c.b16 %v1618, %v1617
    %v1970 = vpack.c.b16 %v1620, %v1619
    %v1971 = vpack.c.b16 %v1622, %v1621
    %v1972 = vpack.c.b16 %v1624, %v1623
    %v1973 = vpack.c.b16 %v1626, %v1625
    %v1974 = vpack.c.b16 %v1628, %v1627
    %v1975 = vpack.c.b16 %v1630, %v1629
    %v1976 = vpack.c.b16 %v1632, %v1631
    %v1977 = vpack.c.b16 %v1634, %v1633
    %v1978 = vpack.c.b16 %v1636, %v1635
    %v1979 = vpack.c.b16 %v1638, %v1637
    %v1980 = vpack.c.b16 %v1640, %v1639
    %v1981 = vpack.c.b16 %v1642, %v1641
    %v1982 = vpack.c.b16 %v1644, %v1643
    %v1983 = vpack.c.b16 %v1646, %v1645
    %v1984 = vpack.c.b16 %v1648, %v1647
    %v1985 = vpack.c.b16 %v1650, %v1649
    %v1986 = vpack.c.b16 %v1652, %v1651
    %v1987 = vpack.c.b16 %v1654, %v1653
    %v1988 = vpack.c.b16 %v1656, %v1655
    %v1989 = vpack.c.b16 %v1658, %v1657
    %v1990 = vpack.c.b16 %v1660, %v1659
    %v1991 = vpack.c.b16 %v1662, %v1661
    %v1992 = vpack.c.b16 %v1664, %v1663
    %v1993 = vpack.c.b16 %v1666, %v1665
    %v1994 = vpack.c.b16 %v1668, %v1667
    %v1995 = vpack.c.b16 %v1670, %v1669
    %v1996 = vpack.c.b16 %v1672, %v1671
    %v1997 = vpack.c.b16 %v1674, %v1673
    %v1998 = vpack.c.b16 %v1676, %v1675
    %v1999 = vpack.c.b16 %v1678, %v1677
    %v2000 = vpack.c.b16 %v1680, %v1679
    %v2001 = vpack.c.b16 %v1682, %v1681
    %v2002 = vpack.c.b16 %v1684, %v1683
    %v2003 = vpack.c.b16 %v1686, %v1685
    %v2004 = vpack.c.b16 %v1688, %v1687
    %v2005 = vpack.c.b16 %v1690, %v1689
    %v2006 = vpack.c.b16 %v1692, %v1691
    %v2007 = vpack.c.b16 %v1694, %v1693
    %v2008 = vpack.c.b16 %v1696, %v1695
    %v2009 = vpack.c.b16 %v1698, %v1697
    %v2010 = vpack.c.b16 %v1700, %v1699
    %v2011 = vpack.c.b16 %v1702, %v1701
    %v2012 = vpack.c.b16 %v1704, %v1703
    %v2013 = vpack.c.b16 %v1706, %v1705
    %v2014 = vpack.c.b16 %v1708, %v1707
    %v2015 = vpack.c.b16 %v1710, %v1709
    %v2016 = vpack.c.b16 %v1712, %v1711
    %v2017 = vpack.c.b16 %v1714, %v1713
    %v2018 = vpack.c.b16 %v1716, %v1715
    %v2019 = vpack.c.b16 %v1718, %v1717
    %v2020 = vpack.c.b16 %v1720, %v1719
    %v2021 = vpack.c.b16 %v1722, %v1721
    %v2022 = vpack.c.b16 %v1724, %v1723
    %v2023 = vpack.c.b16 %v1726, %v1725
    %v2024 = vpack.c.b16 %v1728, %v1727
    %v2025 = vpack.c.b16 %v1730, %v1729
    %v2026 = vpack.c.b16 %v1732, %v1731
    %v2027 = vpack.c.b16 %v1734, %v1733
    %v2028 = vpack.c.b16 %v1736, %v1735
    %v2029 = vpack.c.b16 %v1738, %v1737
    %v2030 = vpack.c.b16 %v1740, %v1739
    %v2031 = vpack.c.b16 %v1742, %v1741
    %v2032 = vpack.c.b16 %v1744, %v1743
    %v2033 = vpack.c.b16 %v1746, %v1745
    %v2034 = vpack.c.b16 %v1748, %v1747
    %v2035 = vpack.c.b16 %v1750, %v1749
    %v2036 = vpack.c.b16 %v1752, %v1751
    %v2037 = vpack.c.b16 %v1754, %v1753
    %v2038 = vpack.c.b16 %v1756, %v1755
    %v2039 = vpack.c.b16 %v1758, %v1757
    %v2040 = vpack.c.b16 %v1760, %v1759
    %v2041 = vpack.c.b16 %v1762, %v1761
    %v2042 = vpack.c.b16 %v1764, %v1763
    %v2043 = vpack.c.b16 %v1766, %v1765
    %v2044 = vpack.c.b16 %v1768, %v1767
    %v2045 = vpack.c.b16 %v1770, %v1769
    %v2046 = vpack.c.b16 %v1772, %v1771
    %v2047 = vpack.c.b16 %v1774, %v1773
    %v2048 = vpack.c.b16 %v1776, %v1775
    %v2049 = vpack.c.b16 %v1778, %v1777
    %v2050 = vpack.c.b16 %v1780, %v1779
    %v2051 = vpack.c.b16 %v1782, %v1781
    %v2052 = vpack.c.b16 %v1784, %v1783
    %v2053 = vpack.c.b16 %v1786, %v1785
    %v2054 = vpack.c.b16 %v1788, %v1787
    %v2055 = vpack.c.b16 %v1790, %v1789
    %v2056 = vpack.c.b16 %v1792, %v1791
    %v2057 = vpack.c.b16 %v1794, %v1793
    %v2058 = vpack.c.b16 %v1796, %v1795
    %v2059 = vpack.c.b16 %v1798, %v1797
    %v2060 = vpack.c.b16 %v1800, %v1799
    %v2061 = vpack.c.b16 %v1802, %v1801
    %v2062 = vpack.c.b16 %v1804, %v1803
    %v2063 = vpack.c.b16 %v1806, %v1805
    %v2064 = vpack.c.b16 %v1808, %v1807
    %2321 = vmatprep.subr.bf16.mxu0 0
    %2322 = vmatpush1.bf16.msra.mxu0 %v1816
    %2323 = vmatprep.subr.bf16.mxu0 0
    %2324 = vmatpush1.bf16.msra.mxu0 %v1815
    %2325 = vmatprep.subr.bf16.mxu0 0
    %2326 = vmatpush1.bf16.msra.mxu0 %v1814
    %2327 = vmatprep.subr.bf16.mxu0 0
    %2328 = vmatpush1.bf16.msra.mxu0 %v1813
    %2329 = vmatprep.subr.bf16.mxu0 0
    %2330 = vmatpush1.bf16.msra.mxu0 %v1812
    %2331 = vmatprep.subr.bf16.mxu0 0
    %2332 = vmatpush1.bf16.msra.mxu0 %v1811
    %2333 = vmatprep.subr.bf16.mxu0 0
    %2334 = vmatpush1.bf16.msra.mxu0 %v1810
    %2335 = vmatprep.subr.bf16.mxu0 0
    %2336 = vmatpush1.bf16.msra.mxu0 %v1809
    %2337 = vmatprep.subr.bf16.mxu0 0
    %2338 = vmatpush2.bf16.msra.mxu0 %v1824
    %2339 = vmatprep.subr.bf16.mxu0 0
    %2340 = vmatpush2.bf16.msra.mxu0 %v1823
    %2341 = vmatprep.subr.bf16.mxu0 0
    %2342 = vmatpush2.bf16.msra.mxu0 %v1822
    %2343 = vmatprep.subr.bf16.mxu0 0
    %2344 = vmatpush2.bf16.msra.mxu0 %v1821
    %2345 = vmatprep.subr.bf16.mxu0 0
    %2346 = vmatpush2.bf16.msra.mxu0 %v1820
    %2347 = vmatprep.subr.bf16.mxu0 0
    %2348 = vmatpush2.bf16.msra.mxu0 %v1819
    %2349 = vmatprep.subr.bf16.mxu0 0
    %2350 = vmatpush2.bf16.msra.mxu0 %v1818
    %2351 = vmatprep.subr.bf16.mxu0 0
    %2352 = vmatpush2.bf16.msra.mxu0 %v1817
    %2353 = vmatprep.mubr.bf16.mxu0 %v594
    %2354 = vmatmul.mubr.bf16.gmra.mxu0 %v580
    %v2355 = vpop.f32.mrf.mxu0
    %v2356 = vadd.f32 %v551, %v2355
    %v2357 = vpop.f32.mrf.mxu0
    %v2358 = vpop.f32.mrf.mxu0
    %v2359 = vpop.f32.mrf.mxu0
    %2360 = vdwg.mxu0
    %2361 = vmatprep.subr.bf16.mxu0 0
    %2362 = vmatpush1.bf16.msra.mxu0 %v1832
    %2363 = vmatprep.subr.bf16.mxu0 0
    %2364 = vmatpush1.bf16.msra.mxu0 %v1831
    %2365 = vmatprep.subr.bf16.mxu0 0
    %2366 = vmatpush1.bf16.msra.mxu0 %v1830
    %2367 = vmatprep.subr.bf16.mxu0 0
    %2368 = vmatpush1.bf16.msra.mxu0 %v1829
    %2369 = vmatprep.subr.bf16.mxu0 0
    %2370 = vmatpush1.bf16.msra.mxu0 %v1828
    %2371 = vmatprep.subr.bf16.mxu0 0
    %2372 = vmatpush1.bf16.msra.mxu0 %v1827
    %2373 = vmatprep.subr.bf16.mxu0 0
    %2374 = vmatpush1.bf16.msra.mxu0 %v1826
    %2375 = vmatprep.subr.bf16.mxu0 0
    %2376 = vmatpush1.bf16.msra.mxu0 %v1825
    %2377 = vmatprep.subr.bf16.mxu0 0
    %2378 = vmatpush2.bf16.msra.mxu0 %v1840
    %2379 = vmatprep.subr.bf16.mxu0 0
    %2380 = vmatpush2.bf16.msra.mxu0 %v1839
    %2381 = vmatprep.subr.bf16.mxu0 0
    %2382 = vmatpush2.bf16.msra.mxu0 %v1838
    %2383 = vmatprep.subr.bf16.mxu0 0
    %2384 = vmatpush2.bf16.msra.mxu0 %v1837
    %2385 = vmatprep.subr.bf16.mxu0 0
    %2386 = vmatpush2.bf16.msra.mxu0 %v1836
    %2387 = vmatprep.subr.bf16.mxu0 0
    %2388 = vmatpush2.bf16.msra.mxu0 %v1835
    %2389 = vmatprep.subr.bf16.mxu0 0
    %2390 = vmatpush2.bf16.msra.mxu0 %v1834
    %2391 = vmatprep.subr.bf16.mxu0 0
    %2392 = vmatpush2.bf16.msra.mxu0 %v1833
    %2393 = vmatprep.mubr.bf16.mxu0 %v604
    %2394 = vmatmul.mubr.bf16.gmra.mxu0 %v602
    %v2395 = vpop.f32.mrf.mxu0
    %v2396 = vadd.f32 %v2356, %v2395
    %v2397 = vpop.f32.mrf.mxu0
    %v2398 = vpop.f32.mrf.mxu0
    %v2399 = vpop.f32.mrf.mxu0
    %2400 = vdwg.mxu0
    %2401 = vmatprep.subr.bf16.mxu0 0
    %2402 = vmatpush1.bf16.msra.mxu0 %v1848
    %2403 = vmatprep.subr.bf16.mxu0 0
    %2404 = vmatpush1.bf16.msra.mxu0 %v1847
    %2405 = vmatprep.subr.bf16.mxu0 0
    %2406 = vmatpush1.bf16.msra.mxu0 %v1846
    %2407 = vmatprep.subr.bf16.mxu0 0
    %2408 = vmatpush1.bf16.msra.mxu0 %v1845
    %2409 = vmatprep.subr.bf16.mxu0 0
    %2410 = vmatpush1.bf16.msra.mxu0 %v1844
    %2411 = vmatprep.subr.bf16.mxu0 0
    %2412 = vmatpush1.bf16.msra.mxu0 %v1843
    %2413 = vmatprep.subr.bf16.mxu0 0
    %2414 = vmatpush1.bf16.msra.mxu0 %v1842
    %2415 = vmatprep.subr.bf16.mxu0 0
    %2416 = vmatpush1.bf16.msra.mxu0 %v1841
    %2417 = vmatprep.subr.bf16.mxu0 0
    %2418 = vmatpush2.bf16.msra.mxu0 %v1856
    %2419 = vmatprep.subr.bf16.mxu0 0
    %2420 = vmatpush2.bf16.msra.mxu0 %v1855
    %2421 = vmatprep.subr.bf16.mxu0 0
    %2422 = vmatpush2.bf16.msra.mxu0 %v1854
    %2423 = vmatprep.subr.bf16.mxu0 0
    %2424 = vmatpush2.bf16.msra.mxu0 %v1853
    %2425 = vmatprep.subr.bf16.mxu0 0
    %2426 = vmatpush2.bf16.msra.mxu0 %v1852
    %2427 = vmatprep.subr.bf16.mxu0 0
    %2428 = vmatpush2.bf16.msra.mxu0 %v1851
    %2429 = vmatprep.subr.bf16.mxu0 0
    %2430 = vmatpush2.bf16.msra.mxu0 %v1850
    %2431 = vmatprep.subr.bf16.mxu0 0
    %2432 = vmatpush2.bf16.msra.mxu0 %v1849
    %2433 = vmatprep.mubr.bf16.mxu0 %v601
    %2434 = vmatmul.mubr.bf16.gmra.mxu0 %v587
    %v2435 = vpop.f32.mrf.mxu0
    %v2436 = vadd.f32 %v2396, %v2435
    %v2437 = vpop.f32.mrf.mxu0
    %v2438 = vpop.f32.mrf.mxu0
    %v2439 = vpop.f32.mrf.mxu0
    %2440 = vdwg.mxu0
    %2441 = vmatprep.subr.bf16.mxu0 0
    %2442 = vmatpush1.bf16.msra.mxu0 %v1864
    %2443 = vmatprep.subr.bf16.mxu0 0
    %2444 = vmatpush1.bf16.msra.mxu0 %v1863
    %2445 = vmatprep.subr.bf16.mxu0 0
    %2446 = vmatpush1.bf16.msra.mxu0 %v1862
    %2447 = vmatprep.subr.bf16.mxu0 0
    %2448 = vmatpush1.bf16.msra.mxu0 %v1861
    %2449 = vmatprep.subr.bf16.mxu0 0
    %2450 = vmatpush1.bf16.msra.mxu0 %v1860
    %2451 = vmatprep.subr.bf16.mxu0 0
    %2452 = vmatpush1.bf16.msra.mxu0 %v1859
    %2453 = vmatprep.subr.bf16.mxu0 0
    %2454 = vmatpush1.bf16.msra.mxu0 %v1858
    %2455 = vmatprep.subr.bf16.mxu0 0
    %2456 = vmatpush1.bf16.msra.mxu0 %v1857
    %2457 = vmatprep.subr.bf16.mxu0 0
    %2458 = vmatpush2.bf16.msra.mxu0 %v1872
    %2459 = vmatprep.subr.bf16.mxu0 0
    %2460 = vmatpush2.bf16.msra.mxu0 %v1871
    %2461 = vmatprep.subr.bf16.mxu0 0
    %2462 = vmatpush2.bf16.msra.mxu0 %v1870
    %2463 = vmatprep.subr.bf16.mxu0 0
    %2464 = vmatpush2.bf16.msra.mxu0 %v1869
    %2465 = vmatprep.subr.bf16.mxu0 0
    %2466 = vmatpush2.bf16.msra.mxu0 %v1868
    %2467 = vmatprep.subr.bf16.mxu0 0
    %2468 = vmatpush2.bf16.msra.mxu0 %v1867
    %2469 = vmatprep.subr.bf16.mxu0 0
    %2470 = vmatpush2.bf16.msra.mxu0 %v1866
    %2471 = vmatprep.subr.bf16.mxu0 0
    %2472 = vmatpush2.bf16.msra.mxu0 %v1865
    %2473 = vmatprep.mubr.bf16.mxu0 %v605
    %2474 = vmatmul.mubr.bf16.gmra.mxu0 %v603
    %v2475 = vpop.f32.mrf.mxu0
    %v2476 = vadd.f32 %v2436, %v2475
    %v2477 = vpop.f32.mrf.mxu0
    %v2478 = vpop.f32.mrf.mxu0
    %v2479 = vpop.f32.mrf.mxu0
    %2480 = vdwg.mxu0
    %2481 = vmatprep.subr.bf16.mxu0 0
    %2482 = vmatpush1.bf16.msra.mxu0 %v1880
    %2483 = vmatprep.subr.bf16.mxu0 0
    %2484 = vmatpush1.bf16.msra.mxu0 %v1879
    %2485 = vmatprep.subr.bf16.mxu0 0
    %2486 = vmatpush1.bf16.msra.mxu0 %v1878
    %2487 = vmatprep.subr.bf16.mxu0 0
    %2488 = vmatpush1.bf16.msra.mxu0 %v1877
    %2489 = vmatprep.subr.bf16.mxu0 0
    %2490 = vmatpush1.bf16.msra.mxu0 %v1876
    %2491 = vmatprep.subr.bf16.mxu0 0
    %2492 = vmatpush1.bf16.msra.mxu0 %v1875
    %2493 = vmatprep.subr.bf16.mxu0 0
    %2494 = vmatpush1.bf16.msra.mxu0 %v1874
    %2495 = vmatprep.subr.bf16.mxu0 0
    %2496 = vmatpush1.bf16.msra.mxu0 %v1873
    %2497 = vmatprep.subr.bf16.mxu0 0
    %2498 = vmatpush2.bf16.msra.mxu0 %v1888
    %2499 = vmatprep.subr.bf16.mxu0 0
    %2500 = vmatpush2.bf16.msra.mxu0 %v1887
    %2501 = vmatprep.subr.bf16.mxu0 0
    %2502 = vmatpush2.bf16.msra.mxu0 %v1886
    %2503 = vmatprep.subr.bf16.mxu0 0
    %2504 = vmatpush2.bf16.msra.mxu0 %v1885
    %2505 = vmatprep.subr.bf16.mxu0 0
    %2506 = vmatpush2.bf16.msra.mxu0 %v1884
    %2507 = vmatprep.subr.bf16.mxu0 0
    %2508 = vmatpush2.bf16.msra.mxu0 %v1883
    %2509 = vmatprep.subr.bf16.mxu0 0
    %2510 = vmatpush2.bf16.msra.mxu0 %v1882
    %2511 = vmatprep.subr.bf16.mxu0 0
    %2512 = vmatpush2.bf16.msra.mxu0 %v1881
    %2513 = vmatprep.mubr.bf16.mxu0 %v643
    %2514 = vmatmul.mubr.bf16.gmra.mxu0 %v629
    %v2515 = vpop.f32.mrf.mxu0
    %v2516 = vadd.f32 %v2476, %v2515
    %v2517 = vpop.f32.mrf.mxu0
    %v2518 = vpop.f32.mrf.mxu0
    %v2519 = vpop.f32.mrf.mxu0
    %2520 = vdwg.mxu0
    %2521 = vmatprep.subr.bf16.mxu0 0
    %2522 = vmatpush1.bf16.msra.mxu0 %v1896
    %2523 = vmatprep.subr.bf16.mxu0 0
    %2524 = vmatpush1.bf16.msra.mxu0 %v1895
    %2525 = vmatprep.subr.bf16.mxu0 0
    %2526 = vmatpush1.bf16.msra.mxu0 %v1894
    %2527 = vmatprep.subr.bf16.mxu0 0
    %2528 = vmatpush1.bf16.msra.mxu0 %v1893
    %2529 = vmatprep.subr.bf16.mxu0 0
    %2530 = vmatpush1.bf16.msra.mxu0 %v1892
    %2531 = vmatprep.subr.bf16.mxu0 0
    %2532 = vmatpush1.bf16.msra.mxu0 %v1891
    %2533 = vmatprep.subr.bf16.mxu0 0
    %2534 = vmatpush1.bf16.msra.mxu0 %v1890
    %2535 = vmatprep.subr.bf16.mxu0 0
    %2536 = vmatpush1.bf16.msra.mxu0 %v1889
    %2537 = vmatprep.subr.bf16.mxu0 0
    %2538 = vmatpush2.bf16.msra.mxu0 %v1904
    %2539 = vmatprep.subr.bf16.mxu0 0
    %2540 = vmatpush2.bf16.msra.mxu0 %v1903
    %2541 = vmatprep.subr.bf16.mxu0 0
    %2542 = vmatpush2.bf16.msra.mxu0 %v1902
    %2543 = vmatprep.subr.bf16.mxu0 0
    %2544 = vmatpush2.bf16.msra.mxu0 %v1901
    %2545 = vmatprep.subr.bf16.mxu0 0
    %2546 = vmatpush2.bf16.msra.mxu0 %v1900
    %2547 = vmatprep.subr.bf16.mxu0 0
    %2548 = vmatpush2.bf16.msra.mxu0 %v1899
    %2549 = vmatprep.subr.bf16.mxu0 0
    %2550 = vmatpush2.bf16.msra.mxu0 %v1898
    %2551 = vmatprep.subr.bf16.mxu0 0
    %2552 = vmatpush2.bf16.msra.mxu0 %v1897
    %2553 = vmatprep.mubr.bf16.mxu0 %v653
    %2554 = vmatmul.mubr.bf16.gmra.mxu0 %v651
    %v2555 = vpop.f32.mrf.mxu0
    %v2556 = vadd.f32 %v2516, %v2555
    %v2557 = vpop.f32.mrf.mxu0
    %v2558 = vpop.f32.mrf.mxu0
    %v2559 = vpop.f32.mrf.mxu0
    %2560 = vdwg.mxu0
    %2561 = vmatprep.subr.bf16.mxu0 0
    %2562 = vmatpush1.bf16.msra.mxu0 %v1912
    %2563 = vmatprep.subr.bf16.mxu0 0
    %2564 = vmatpush1.bf16.msra.mxu0 %v1911
    %2565 = vmatprep.subr.bf16.mxu0 0
    %2566 = vmatpush1.bf16.msra.mxu0 %v1910
    %2567 = vmatprep.subr.bf16.mxu0 0
    %2568 = vmatpush1.bf16.msra.mxu0 %v1909
    %2569 = vmatprep.subr.bf16.mxu0 0
    %2570 = vmatpush1.bf16.msra.mxu0 %v1908
    %2571 = vmatprep.subr.bf16.mxu0 0
    %2572 = vmatpush1.bf16.msra.mxu0 %v1907
    %2573 = vmatprep.subr.bf16.mxu0 0
    %2574 = vmatpush1.bf16.msra.mxu0 %v1906
    %2575 = vmatprep.subr.bf16.mxu0 0
    %2576 = vmatpush1.bf16.msra.mxu0 %v1905
    %2577 = vmatprep.subr.bf16.mxu0 0
    %2578 = vmatpush2.bf16.msra.mxu0 %v1920
    %2579 = vmatprep.subr.bf16.mxu0 0
    %2580 = vmatpush2.bf16.msra.mxu0 %v1919
    %2581 = vmatprep.subr.bf16.mxu0 0
    %2582 = vmatpush2.bf16.msra.mxu0 %v1918
    %2583 = vmatprep.subr.bf16.mxu0 0
    %2584 = vmatpush2.bf16.msra.mxu0 %v1917
    %2585 = vmatprep.subr.bf16.mxu0 0
    %2586 = vmatpush2.bf16.msra.mxu0 %v1916
    %2587 = vmatprep.subr.bf16.mxu0 0
    %2588 = vmatpush2.bf16.msra.mxu0 %v1915
    %2589 = vmatprep.subr.bf16.mxu0 0
    %2590 = vmatpush2.bf16.msra.mxu0 %v1914
    %2591 = vmatprep.subr.bf16.mxu0 0
    %2592 = vmatpush2.bf16.msra.mxu0 %v1913
    %2593 = vmatprep.mubr.bf16.mxu0 %v650
    %2594 = vmatmul.mubr.bf16.gmra.mxu0 %v636
    %v2595 = vpop.f32.mrf.mxu0
    %v2596 = vadd.f32 %v2556, %v2595
    %v2597 = vpop.f32.mrf.mxu0
    %v2598 = vpop.f32.mrf.mxu0
    %v2599 = vpop.f32.mrf.mxu0
    %2600 = vdwg.mxu0
    %2601 = vmatprep.subr.bf16.mxu0 0
    %2602 = vmatpush1.bf16.msra.mxu0 %v1928
    %2603 = vmatprep.subr.bf16.mxu0 0
    %2604 = vmatpush1.bf16.msra.mxu0 %v1927
    %2605 = vmatprep.subr.bf16.mxu0 0
    %2606 = vmatpush1.bf16.msra.mxu0 %v1926
    %2607 = vmatprep.subr.bf16.mxu0 0
    %2608 = vmatpush1.bf16.msra.mxu0 %v1925
    %2609 = vmatprep.subr.bf16.mxu0 0
    %2610 = vmatpush1.bf16.msra.mxu0 %v1924
    %2611 = vmatprep.subr.bf16.mxu0 0
    %2612 = vmatpush1.bf16.msra.mxu0 %v1923
    %2613 = vmatprep.subr.bf16.mxu0 0
    %2614 = vmatpush1.bf16.msra.mxu0 %v1922
    %2615 = vmatprep.subr.bf16.mxu0 0
    %2616 = vmatpush1.bf16.msra.mxu0 %v1921
    %2617 = vmatprep.subr.bf16.mxu0 0
    %2618 = vmatpush2.bf16.msra.mxu0 %v1936
    %2619 = vmatprep.subr.bf16.mxu0 0
    %2620 = vmatpush2.bf16.msra.mxu0 %v1935
    %2621 = vmatprep.subr.bf16.mxu0 0
    %2622 = vmatpush2.bf16.msra.mxu0 %v1934
    %2623 = vmatprep.subr.bf16.mxu0 0
    %2624 = vmatpush2.bf16.msra.mxu0 %v1933
    %2625 = vmatprep.subr.bf16.mxu0 0
    %2626 = vmatpush2.bf16.msra.mxu0 %v1932
    %2627 = vmatprep.subr.bf16.mxu0 0
    %2628 = vmatpush2.bf16.msra.mxu0 %v1931
    %2629 = vmatprep.subr.bf16.mxu0 0
    %2630 = vmatpush2.bf16.msra.mxu0 %v1930
    %2631 = vmatprep.subr.bf16.mxu0 0
    %2632 = vmatpush2.bf16.msra.mxu0 %v1929
    %2633 = vmatprep.mubr.bf16.mxu0 %v654
    %2634 = vmatmul.mubr.bf16.gmra.mxu0 %v652
    %v2635 = vpop.f32.mrf.mxu0
    %v2636 = vadd.f32 %v2596, %v2635
    %v2637 = vpop.f32.mrf.mxu0
    %v2638 = vpop.f32.mrf.mxu0
    %v2639 = vpop.f32.mrf.mxu0
    %2640 = vdwg.mxu0
    %2641 = vmatprep.subr.bf16.mxu0 0
    %2642 = vmatpush1.bf16.msra.mxu0 %v1944
    %2643 = vmatprep.subr.bf16.mxu0 0
    %2644 = vmatpush1.bf16.msra.mxu0 %v1943
    %2645 = vmatprep.subr.bf16.mxu0 0
    %2646 = vmatpush1.bf16.msra.mxu0 %v1942
    %2647 = vmatprep.subr.bf16.mxu0 0
    %2648 = vmatpush1.bf16.msra.mxu0 %v1941
    %2649 = vmatprep.subr.bf16.mxu0 0
    %2650 = vmatpush1.bf16.msra.mxu0 %v1940
    %2651 = vmatprep.subr.bf16.mxu0 0
    %2652 = vmatpush1.bf16.msra.mxu0 %v1939
    %2653 = vmatprep.subr.bf16.mxu0 0
    %2654 = vmatpush1.bf16.msra.mxu0 %v1938
    %2655 = vmatprep.subr.bf16.mxu0 0
    %2656 = vmatpush1.bf16.msra.mxu0 %v1937
    %2657 = vmatprep.subr.bf16.mxu0 0
    %2658 = vmatpush2.bf16.msra.mxu0 %v1952
    %2659 = vmatprep.subr.bf16.mxu0 0
    %2660 = vmatpush2.bf16.msra.mxu0 %v1951
    %2661 = vmatprep.subr.bf16.mxu0 0
    %2662 = vmatpush2.bf16.msra.mxu0 %v1950
    %2663 = vmatprep.subr.bf16.mxu0 0
    %2664 = vmatpush2.bf16.msra.mxu0 %v1949
    %2665 = vmatprep.subr.bf16.mxu0 0
    %2666 = vmatpush2.bf16.msra.mxu0 %v1948
    %2667 = vmatprep.subr.bf16.mxu0 0
    %2668 = vmatpush2.bf16.msra.mxu0 %v1947
    %2669 = vmatprep.subr.bf16.mxu0 0
    %2670 = vmatpush2.bf16.msra.mxu0 %v1946
    %2671 = vmatprep.subr.bf16.mxu0 0
    %2672 = vmatpush2.bf16.msra.mxu0 %v1945
    %2673 = vmatprep.mubr.bf16.mxu0 %v692
    %2674 = vmatmul.mubr.bf16.gmra.mxu0 %v678
    %v2675 = vpop.f32.mrf.mxu0
    %v2676 = vadd.f32 %v2636, %v2675
    %v2677 = vpop.f32.mrf.mxu0
    %v2678 = vpop.f32.mrf.mxu0
    %v2679 = vpop.f32.mrf.mxu0
    %2680 = vdwg.mxu0
    %2681 = vmatprep.subr.bf16.mxu0 0
    %2682 = vmatpush1.bf16.msra.mxu0 %v1960
    %2683 = vmatprep.subr.bf16.mxu0 0
    %2684 = vmatpush1.bf16.msra.mxu0 %v1959
    %2685 = vmatprep.subr.bf16.mxu0 0
    %2686 = vmatpush1.bf16.msra.mxu0 %v1958
    %2687 = vmatprep.subr.bf16.mxu0 0
    %2688 = vmatpush1.bf16.msra.mxu0 %v1957
    %2689 = vmatprep.subr.bf16.mxu0 0
    %2690 = vmatpush1.bf16.msra.mxu0 %v1956
    %2691 = vmatprep.subr.bf16.mxu0 0
    %2692 = vmatpush1.bf16.msra.mxu0 %v1955
    %2693 = vmatprep.subr.bf16.mxu0 0
    %2694 = vmatpush1.bf16.msra.mxu0 %v1954
    %2695 = vmatprep.subr.bf16.mxu0 0
    %2696 = vmatpush1.bf16.msra.mxu0 %v1953
    %2697 = vmatprep.subr.bf16.mxu0 0
    %2698 = vmatpush2.bf16.msra.mxu0 %v1968
    %2699 = vmatprep.subr.bf16.mxu0 0
    %2700 = vmatpush2.bf16.msra.mxu0 %v1967
    %2701 = vmatprep.subr.bf16.mxu0 0
    %2702 = vmatpush2.bf16.msra.mxu0 %v1966
    %2703 = vmatprep.subr.bf16.mxu0 0
    %2704 = vmatpush2.bf16.msra.mxu0 %v1965
    %2705 = vmatprep.subr.bf16.mxu0 0
    %2706 = vmatpush2.bf16.msra.mxu0 %v1964
    %2707 = vmatprep.subr.bf16.mxu0 0
    %2708 = vmatpush2.bf16.msra.mxu0 %v1963
    %2709 = vmatprep.subr.bf16.mxu0 0
    %2710 = vmatpush2.bf16.msra.mxu0 %v1962
    %2711 = vmatprep.subr.bf16.mxu0 0
    %2712 = vmatpush2.bf16.msra.mxu0 %v1961
    %2713 = vmatprep.mubr.bf16.mxu0 %v702
    %2714 = vmatmul.mubr.bf16.gmra.mxu0 %v700
    %v2715 = vpop.f32.mrf.mxu0
    %v2716 = vadd.f32 %v2676, %v2715
    %v2717 = vpop.f32.mrf.mxu0
    %v2718 = vpop.f32.mrf.mxu0
    %v2719 = vpop.f32.mrf.mxu0
    %2720 = vdwg.mxu0
    %2721 = vmatprep.subr.bf16.mxu0 0
    %2722 = vmatpush1.bf16.msra.mxu0 %v1976
    %2723 = vmatprep.subr.bf16.mxu0 0
    %2724 = vmatpush1.bf16.msra.mxu0 %v1975
    %2725 = vmatprep.subr.bf16.mxu0 0
    %2726 = vmatpush1.bf16.msra.mxu0 %v1974
    %2727 = vmatprep.subr.bf16.mxu0 0
    %2728 = vmatpush1.bf16.msra.mxu0 %v1973
    %2729 = vmatprep.subr.bf16.mxu0 0
    %2730 = vmatpush1.bf16.msra.mxu0 %v1972
    %2731 = vmatprep.subr.bf16.mxu0 0
    %2732 = vmatpush1.bf16.msra.mxu0 %v1971
    %2733 = vmatprep.subr.bf16.mxu0 0
    %2734 = vmatpush1.bf16.msra.mxu0 %v1970
    %2735 = vmatprep.subr.bf16.mxu0 0
    %2736 = vmatpush1.bf16.msra.mxu0 %v1969
    %2737 = vmatprep.subr.bf16.mxu0 0
    %2738 = vmatpush2.bf16.msra.mxu0 %v1984
    %2739 = vmatprep.subr.bf16.mxu0 0
    %2740 = vmatpush2.bf16.msra.mxu0 %v1983
    %2741 = vmatprep.subr.bf16.mxu0 0
    %2742 = vmatpush2.bf16.msra.mxu0 %v1982
    %2743 = vmatprep.subr.bf16.mxu0 0
    %2744 = vmatpush2.bf16.msra.mxu0 %v1981
    %2745 = vmatprep.subr.bf16.mxu0 0
    %2746 = vmatpush2.bf16.msra.mxu0 %v1980
    %2747 = vmatprep.subr.bf16.mxu0 0
    %2748 = vmatpush2.bf16.msra.mxu0 %v1979
    %2749 = vmatprep.subr.bf16.mxu0 0
    %2750 = vmatpush2.bf16.msra.mxu0 %v1978
    %2751 = vmatprep.subr.bf16.mxu0 0
    %2752 = vmatpush2.bf16.msra.mxu0 %v1977
    %2753 = vmatprep.mubr.bf16.mxu0 %v699
    %2754 = vmatmul.mubr.bf16.gmra.mxu0 %v685
    %v2755 = vpop.f32.mrf.mxu0
    %v2756 = vadd.f32 %v2716, %v2755
    %v2757 = vpop.f32.mrf.mxu0
    %v2758 = vpop.f32.mrf.mxu0
    %v2759 = vpop.f32.mrf.mxu0
    %2760 = vdwg.mxu0
    %2761 = vmatprep.subr.bf16.mxu0 0
    %2762 = vmatpush1.bf16.msra.mxu0 %v1992
    %2763 = vmatprep.subr.bf16.mxu0 0
    %2764 = vmatpush1.bf16.msra.mxu0 %v1991
    %2765 = vmatprep.subr.bf16.mxu0 0
    %2766 = vmatpush1.bf16.msra.mxu0 %v1990
    %2767 = vmatprep.subr.bf16.mxu0 0
    %2768 = vmatpush1.bf16.msra.mxu0 %v1989
    %2769 = vmatprep.subr.bf16.mxu0 0
    %2770 = vmatpush1.bf16.msra.mxu0 %v1988
    %2771 = vmatprep.subr.bf16.mxu0 0
    %2772 = vmatpush1.bf16.msra.mxu0 %v1987
    %2773 = vmatprep.subr.bf16.mxu0 0
    %2774 = vmatpush1.bf16.msra.mxu0 %v1986
    %2775 = vmatprep.subr.bf16.mxu0 0
    %2776 = vmatpush1.bf16.msra.mxu0 %v1985
    %2777 = vmatprep.subr.bf16.mxu0 0
    %2778 = vmatpush2.bf16.msra.mxu0 %v2000
    %2779 = vmatprep.subr.bf16.mxu0 0
    %2780 = vmatpush2.bf16.msra.mxu0 %v1999
    %2781 = vmatprep.subr.bf16.mxu0 0
    %2782 = vmatpush2.bf16.msra.mxu0 %v1998
    %2783 = vmatprep.subr.bf16.mxu0 0
    %2784 = vmatpush2.bf16.msra.mxu0 %v1997
    %2785 = vmatprep.subr.bf16.mxu0 0
    %2786 = vmatpush2.bf16.msra.mxu0 %v1996
    %2787 = vmatprep.subr.bf16.mxu0 0
    %2788 = vmatpush2.bf16.msra.mxu0 %v1995
    %2789 = vmatprep.subr.bf16.mxu0 0
    %2790 = vmatpush2.bf16.msra.mxu0 %v1994
    %2791 = vmatprep.subr.bf16.mxu0 0
    %2792 = vmatpush2.bf16.msra.mxu0 %v1993
    %2793 = vmatprep.mubr.bf16.mxu0 %v703
    %2794 = vmatmul.mubr.bf16.gmra.mxu0 %v701
    %v2795 = vpop.f32.mrf.mxu0
    %v2796 = vadd.f32 %v2756, %v2795
    %v2797 = vpop.f32.mrf.mxu0
    %v2798 = vpop.f32.mrf.mxu0
    %v2799 = vpop.f32.mrf.mxu0
    %2800 = vdwg.mxu0
    %2801 = vmatprep.subr.bf16.mxu0 0
    %2802 = vmatpush1.bf16.msra.mxu0 %v2008
    %2803 = vmatprep.subr.bf16.mxu0 0
    %2804 = vmatpush1.bf16.msra.mxu0 %v2007
    %2805 = vmatprep.subr.bf16.mxu0 0
    %2806 = vmatpush1.bf16.msra.mxu0 %v2006
    %2807 = vmatprep.subr.bf16.mxu0 0
    %2808 = vmatpush1.bf16.msra.mxu0 %v2005
    %2809 = vmatprep.subr.bf16.mxu0 0
    %2810 = vmatpush1.bf16.msra.mxu0 %v2004
    %2811 = vmatprep.subr.bf16.mxu0 0
    %2812 = vmatpush1.bf16.msra.mxu0 %v2003
    %2813 = vmatprep.subr.bf16.mxu0 0
    %2814 = vmatpush1.bf16.msra.mxu0 %v2002
    %2815 = vmatprep.subr.bf16.mxu0 0
    %2816 = vmatpush1.bf16.msra.mxu0 %v2001
    %2817 = vmatprep.subr.bf16.mxu0 0
    %2818 = vmatpush2.bf16.msra.mxu0 %v2016
    %2819 = vmatprep.subr.bf16.mxu0 0
    %2820 = vmatpush2.bf16.msra.mxu0 %v2015
    %2821 = vmatprep.subr.bf16.mxu0 0
    %2822 = vmatpush2.bf16.msra.mxu0 %v2014
    %2823 = vmatprep.subr.bf16.mxu0 0
    %2824 = vmatpush2.bf16.msra.mxu0 %v2013
    %2825 = vmatprep.subr.bf16.mxu0 0
    %2826 = vmatpush2.bf16.msra.mxu0 %v2012
    %2827 = vmatprep.subr.bf16.mxu0 0
    %2828 = vmatpush2.bf16.msra.mxu0 %v2011
    %2829 = vmatprep.subr.bf16.mxu0 0
    %2830 = vmatpush2.bf16.msra.mxu0 %v2010
    %2831 = vmatprep.subr.bf16.mxu0 0
    %2832 = vmatpush2.bf16.msra.mxu0 %v2009
    %2833 = vmatprep.mubr.bf16.mxu0 %v741
    %2834 = vmatmul.mubr.bf16.gmra.mxu0 %v727
    %v2835 = vpop.f32.mrf.mxu0
    %v2836 = vadd.f32 %v2796, %v2835
    %v2837 = vpop.f32.mrf.mxu0
    %v2838 = vpop.f32.mrf.mxu0
    %v2839 = vpop.f32.mrf.mxu0
    %2840 = vdwg.mxu0
    %2841 = vmatprep.subr.bf16.mxu0 0
    %2842 = vmatpush1.bf16.msra.mxu0 %v2024
    %2843 = vmatprep.subr.bf16.mxu0 0
    %2844 = vmatpush1.bf16.msra.mxu0 %v2023
    %2845 = vmatprep.subr.bf16.mxu0 0
    %2846 = vmatpush1.bf16.msra.mxu0 %v2022
    %2847 = vmatprep.subr.bf16.mxu0 0
    %2848 = vmatpush1.bf16.msra.mxu0 %v2021
    %2849 = vmatprep.subr.bf16.mxu0 0
    %2850 = vmatpush1.bf16.msra.mxu0 %v2020
    %2851 = vmatprep.subr.bf16.mxu0 0
    %2852 = vmatpush1.bf16.msra.mxu0 %v2019
    %2853 = vmatprep.subr.bf16.mxu0 0
    %2854 = vmatpush1.bf16.msra.mxu0 %v2018
    %2855 = vmatprep.subr.bf16.mxu0 0
    %2856 = vmatpush1.bf16.msra.mxu0 %v2017
    %2857 = vmatprep.subr.bf16.mxu0 0
    %2858 = vmatpush2.bf16.msra.mxu0 %v2032
    %2859 = vmatprep.subr.bf16.mxu0 0
    %2860 = vmatpush2.bf16.msra.mxu0 %v2031
    %2861 = vmatprep.subr.bf16.mxu0 0
    %2862 = vmatpush2.bf16.msra.mxu0 %v2030
    %2863 = vmatprep.subr.bf16.mxu0 0
    %2864 = vmatpush2.bf16.msra.mxu0 %v2029
    %2865 = vmatprep.subr.bf16.mxu0 0
    %2866 = vmatpush2.bf16.msra.mxu0 %v2028
    %2867 = vmatprep.subr.bf16.mxu0 0
    %2868 = vmatpush2.bf16.msra.mxu0 %v2027
    %2869 = vmatprep.subr.bf16.mxu0 0
    %2870 = vmatpush2.bf16.msra.mxu0 %v2026
    %2871 = vmatprep.subr.bf16.mxu0 0
    %2872 = vmatpush2.bf16.msra.mxu0 %v2025
    %2873 = vmatprep.mubr.bf16.mxu0 %v751
    %2874 = vmatmul.mubr.bf16.gmra.mxu0 %v749
    %v2875 = vpop.f32.mrf.mxu0
    %v2876 = vadd.f32 %v2836, %v2875
    %v2877 = vpop.f32.mrf.mxu0
    %v2878 = vpop.f32.mrf.mxu0
    %v2879 = vpop.f32.mrf.mxu0
    %2880 = vdwg.mxu0
    %2881 = vmatprep.subr.bf16.mxu0 0
    %2882 = vmatpush1.bf16.msra.mxu0 %v2040
    %2883 = vmatprep.subr.bf16.mxu0 0
    %2884 = vmatpush1.bf16.msra.mxu0 %v2039
    %2885 = vmatprep.subr.bf16.mxu0 0
    %2886 = vmatpush1.bf16.msra.mxu0 %v2038
    %2887 = vmatprep.subr.bf16.mxu0 0
    %2888 = vmatpush1.bf16.msra.mxu0 %v2037
    %2889 = vmatprep.subr.bf16.mxu0 0
    %2890 = vmatpush1.bf16.msra.mxu0 %v2036
    %2891 = vmatprep.subr.bf16.mxu0 0
    %2892 = vmatpush1.bf16.msra.mxu0 %v2035
    %2893 = vmatprep.subr.bf16.mxu0 0
    %2894 = vmatpush1.bf16.msra.mxu0 %v2034
    %2895 = vmatprep.subr.bf16.mxu0 0
    %2896 = vmatpush1.bf16.msra.mxu0 %v2033
    %2897 = vmatprep.subr.bf16.mxu0 0
    %2898 = vmatpush2.bf16.msra.mxu0 %v2048
    %2899 = vmatprep.subr.bf16.mxu0 0
    %2900 = vmatpush2.bf16.msra.mxu0 %v2047
    %2901 = vmatprep.subr.bf16.mxu0 0
    %2902 = vmatpush2.bf16.msra.mxu0 %v2046
    %2903 = vmatprep.subr.bf16.mxu0 0
    %2904 = vmatpush2.bf16.msra.mxu0 %v2045
    %2905 = vmatprep.subr.bf16.mxu0 0
    %2906 = vmatpush2.bf16.msra.mxu0 %v2044
    %2907 = vmatprep.subr.bf16.mxu0 0
    %2908 = vmatpush2.bf16.msra.mxu0 %v2043
    %2909 = vmatprep.subr.bf16.mxu0 0
    %2910 = vmatpush2.bf16.msra.mxu0 %v2042
    %2911 = vmatprep.subr.bf16.mxu0 0
    %2912 = vmatpush2.bf16.msra.mxu0 %v2041
    %2913 = vmatprep.mubr.bf16.mxu0 %v748
    %2914 = vmatmul.mubr.bf16.gmra.mxu0 %v734
    %v2915 = vpop.f32.mrf.mxu0
    %v2916 = vadd.f32 %v2876, %v2915
    %v2917 = vpop.f32.mrf.mxu0
    %v2918 = vpop.f32.mrf.mxu0
    %v2919 = vpop.f32.mrf.mxu0
    %2920 = vdwg.mxu0
    %2921 = vmatprep.subr.bf16.mxu0 0
    %2922 = vmatpush1.bf16.msra.mxu0 %v2056
    %2923 = vmatprep.subr.bf16.mxu0 0
    %2924 = vmatpush1.bf16.msra.mxu0 %v2055
    %2925 = vmatprep.subr.bf16.mxu0 0
    %2926 = vmatpush1.bf16.msra.mxu0 %v2054
    %2927 = vmatprep.subr.bf16.mxu0 0
    %2928 = vmatpush1.bf16.msra.mxu0 %v2053
    %2929 = vmatprep.subr.bf16.mxu0 0
    %2930 = vmatpush1.bf16.msra.mxu0 %v2052
    %2931 = vmatprep.subr.bf16.mxu0 0
    %2932 = vmatpush1.bf16.msra.mxu0 %v2051
    %2933 = vmatprep.subr.bf16.mxu0 0
    %2934 = vmatpush1.bf16.msra.mxu0 %v2050
    %2935 = vmatprep.subr.bf16.mxu0 0
    %2936 = vmatpush1.bf16.msra.mxu0 %v2049
    %2937 = vmatprep.subr.bf16.mxu0 0
    %2938 = vmatpush2.bf16.msra.mxu0 %v2064
    %2939 = vmatprep.subr.bf16.mxu0 0
    %2940 = vmatpush2.bf16.msra.mxu0 %v2063
    %2941 = vmatprep.subr.bf16.mxu0 0
    %2942 = vmatpush2.bf16.msra.mxu0 %v2062
    %2943 = vmatprep.subr.bf16.mxu0 0
    %2944 = vmatpush2.bf16.msra.mxu0 %v2061
    %2945 = vmatprep.subr.bf16.mxu0 0
    %2946 = vmatpush2.bf16.msra.mxu0 %v2060
    %2947 = vmatprep.subr.bf16.mxu0 0
    %2948 = vmatpush2.bf16.msra.mxu0 %v2059
    %2949 = vmatprep.subr.bf16.mxu0 0
    %2950 = vmatpush2.bf16.msra.mxu0 %v2058
    %2951 = vmatprep.subr.bf16.mxu0 0
    %2952 = vmatpush2.bf16.msra.mxu0 %v2057
    %2953 = vmatprep.mubr.bf16.mxu0 %v752
    %2954 = vmatmul.mubr.bf16.gmra.mxu0 %v750
    %v2955 = vpop.f32.mrf.mxu0
    %v2956 = vadd.f32 %v2916, %v2955
    %v2957 = vpop.f32.mrf.mxu0
    %v2958 = vpop.f32.mrf.mxu0
    %v2959 = vpop.f32.mrf.mxu0
    %2960 = vdwg.mxu0
    %vm2961 = vcmask 74752
    %v2962 = vsel %vm2961, %v2956, -inf
    %2963 = vmax.xlane.f32.xlu0 %v2962
    %v2964 = vpop.xlane.xlu0 %2963
    %v2965 = vsub.f32 %v2956, %v2964
    %v2966 = vmul.f32 %v2965, 1.442695
    %v2967 = vpow.pop %v2966
    %v2968 = vsel %vm2961, %v2967, 0.0
    %2969 = vadd.xlane.f32.xlu0 %v2968
    %v2970 = vpop.xlane.xlu0 %2969
    %v2971 = vlog2.pop %v2970
    %v2972 = vmul.f32 %v2971, 0.6931472
    %v2973 = vsub.f32 %v2965, %v2972
    %2974 = vst.msk [vmem:[#allocation5] sm:$0x3] %vm2961, %v2973
    // Predicated region
    $region18: #{forward.1} parent=1 // pred_check
      _
    $region19: #{forward.1} parent=1 // pred_check_branch
      %2976 = sbr.rel (0) target = $region21
    $region20: #{forward.1} parent=1 // pred_region
      %s2978 = ssub.s32 32, 32
      %2979 = vsyncadd [#allocation4], %s2978
      %s2981 = sshll.u32 [#allocation5], 4
      %s2982 = int_to_ptr.vmem [resolvable:$true] %s2981
      %2984 = dma.vmem_to_hbm [thread:$0]  %s2982, 32, %s3, [#allocation4]
    $region21: #{forward.1} parent=1 // pred_fallthru
      _
    // Predicated region
    $region22: #{forward.1} parent=1 // pred_check
      _
    $region23: #{forward.1} parent=1 // pred_check_branch
      %2986 = sbr.rel (0) target = $region25
    $region24: #{forward.1} parent=1 // pred_region
      %2987 = dma.done [#allocation4], 32
    $region25: #{forward.1} parent=1 // pred_fallthru
      _
    %2988 = vsyncpa [#allocation3], 1
    %2989 = vsyncpa [#allocation4], 1

</llo_original>
